<compile_context>
chip_gen: v7x
topology: tpu7x:2x2x1
jax: 0.10.0
libtpu: 0.0.40
codegen_flags: <defaults>
</compile_context>

<pallas_src>
import functools

import jax
import jax.numpy as jnp
from jax.experimental import pallas as pl
from jax.experimental.pallas import tpu as pltpu


def _multirc_kernel(frames, batch, n_hid, alpha, decay, thr,
                    x2d_ref,        # (frames*batch, N_in)    time-major flattened input
                    w_ref,          # (N_in, 2*N_hid)         [W_in1 | W_in2]
                    b_ref,          # (1, 2*N_hid)            [b1 | b2]
                    a_ref,          # (2*N_hid, 2*N_hid)      block_diag(A1, A2)
                    mem0_ref,       # (batch, 2*N_hid)        [mem0_l0 | mem0_l1]
                    mems_out_ref,   # (frames+1, batch, 2*N_hid)
                    spikes_out_ref  # (frames+1, batch, 2*N_hid)
                    ):
    one_minus_alpha = 1.0 - alpha

    # ---- prologue: hoisted, state-independent input projection for all frames and
    # both layers as a single MXU matmul, pre-scaled by (1 - alpha).
    u_all = jnp.dot(x2d_ref[...], w_ref[...], preferred_element_type=jnp.float32)
    upre = one_minus_alpha * (u_all + b_ref[...])          # (frames*batch, 2*N_hid)

    mem = mem0_ref[...]                                    # (batch, 2*N_hid), 2 vregs
    spike = jnp.zeros_like(mem)

    # ---- t = 0 slice written in-kernel (mem init / zero spikes): full-width store.
    mems_out_ref[0] = mem
    spikes_out_ref[0] = spike

    # ---- recurrence: fully unrolled static loop; only the state-dependent recurrent
    # matmul + tanh + LIF update remain on the serial critical path.
    for t in range(frames):
        u_t = upre[t * batch:(t + 1) * batch, :]           # static, sublane-aligned slice
        # a_ref[...] fed straight into the dot each step: no 64-vreg live value, no
        # spill/reload interleaved with the recurrence.
        r = jnp.dot(spike, a_ref[...], preferred_element_type=jnp.float32)
        # TODO(synk): `act` is not defined in the provided source; standard reservoir
        # computing uses tanh, which is what we implement here.
        y = jnp.tanh(alpha * r + u_t)
        mem = mem * decay - thr * (1.0 - spike) + y
        spike = (mem > thr).astype(jnp.float32)

        mems_out_ref[t + 1] = mem                          # one full (8, 2*N_hid) store
        spikes_out_ref[t + 1] = spike


def pack_params(params):
    """One-time packing of the static reservoir parameters (hoisted out of forward)."""
    win1, a1, b1, win2, a2, b2 = params
    f32 = jnp.float32
    n_hid = win1.shape[1]
    w_cat = jnp.concatenate([win1, win2], axis=1).astype(f32)       # (N_in, 2*N_hid)
    b_cat = jnp.concatenate([b1, b2], axis=1).astype(f32)           # (1, 2*N_hid)
    zeros = jnp.zeros((n_hid, n_hid), f32)
    a_blk = jnp.block([[a1, zeros], [zeros, a2]]).astype(f32)       # (2*N_hid, 2*N_hid)
    return w_cat, b_cat, a_blk


@functools.partial(jax.jit, static_argnames=("alpha", "decay", "thr"))
def multirc_forward(x, mem0, packed, *, alpha, decay, thr):
    """
    x:      (batch, frames, N_in)   float32   (PyTorch layout)
    mem0:   (2, batch, N_hid)       float32   initial membrane (t=0)
    packed: output of pack_params(params)
    returns (mems, spikes): each (2, batch, frames+1, N_hid)
    """
    batch, frames, N_in = x.shape
    N_hid = mem0.shape[-1]
    w_cat, b_cat, a_blk = packed
    f32 = jnp.float32

    # Time-major flatten so the hoisted input projection is one big matmul.
    x2d = jnp.transpose(x, (1, 0, 2)).reshape(frames * batch, N_in).astype(f32)
    # Concatenated initial membrane state, (batch, 2*N_hid).
    mem0c = jnp.concatenate([mem0[0], mem0[1]], axis=1).astype(f32)

    kernel = functools.partial(_multirc_kernel, frames, batch, N_hid,
                               float(alpha), float(decay), float(thr))

    vmem = pl.BlockSpec(memory_space=pltpu.MemorySpace.VMEM)  # whole array in VMEM
    mems_tm, spikes_tm = pl.pallas_call(
        kernel,
        out_shape=(
            jax.ShapeDtypeStruct((frames + 1, batch, 2 * N_hid), f32),
            jax.ShapeDtypeStruct((frames + 1, batch, 2 * N_hid), f32),
        ),
        in_specs=[vmem, vmem, vmem, vmem, vmem],
        out_specs=(vmem, vmem),
    )(x2d, w_cat, b_cat, a_blk, mem0c)

    def unpack(y_tm):
        # (frames+1, batch, 2*N_hid) -> (2, batch, frames+1, N_hid)
        y = jnp.stack([y_tm[..., :N_hid], y_tm[..., N_hid:]], axis=0)
        return jnp.swapaxes(y, 1, 2)

    return unpack(mems_tm), unpack(spikes_tm)


def multirc_reference(x, mem0, params, *, alpha, decay, thr):
    """Pure-JAX reference mirroring the PyTorch forward loop."""
    win1, a1, b1, win2, a2, b2 = params
    batch, frames, _ = x.shape
    N_hid = mem0.shape[-1]
    W = [(win1, a1, b1), (win2, a2, b2)]
    mems = [[mem0[0]], [mem0[1]]]
    spikes = [[jnp.zeros((batch, N_hid), jnp.float32)],
              [jnp.zeros((batch, N_hid), jnp.float32)]]
    for t in range(frames):
        for l in range(2):
            win, a, b = W[l]
            U = x[:, t, :] @ win
            r = spikes[l][t] @ a
            y = jnp.tanh(alpha * r + (1.0 - alpha) * (U + b))
            mem = mems[l][t] * decay - thr * (1.0 - spikes[l][t]) + y
            spk = (mem > thr).astype(jnp.float32)
            mems[l].append(mem)
            spikes[l].append(spk)
    mems = jnp.stack([jnp.stack(m, axis=1) for m in mems], axis=0)
    spikes = jnp.stack([jnp.stack(s, axis=1) for s in spikes], axis=0)
    return mems, spikes


if __name__ == "__main__":
    # Config (deterministic, synthetic): mirrors Config fields used by the module.
    batch, frames, N_in, N_hid = 8, 6, 16, 128
    Win, bias_scale, alpha = 1.0, 0.1, 0.5
    decay, thr, mem_init = 0.5, 0.5, 0.1    # scalar LIF_decay branch

    key = jax.random.PRNGKey(0)
    ks = jax.random.split(key, 9)
    f32 = jnp.float32
    # Reservoir 1 params (A_cluster adjacency approximated by a uniform recurrent matrix).
    win1 = jax.random.uniform(ks[0], (N_in, N_hid), minval=-Win, maxval=Win, dtype=f32)
    a1 = jax.random.uniform(ks[1], (N_hid, N_hid), minval=-0.5, maxval=0.5, dtype=f32)
    b1 = jax.random.uniform(ks[2], (1, N_hid), minval=-bias_scale, maxval=bias_scale, dtype=f32)
    # Reservoir 2 params.
    win2 = jax.random.uniform(ks[3], (N_in, N_hid), minval=-Win, maxval=Win, dtype=f32)
    a2 = jax.random.uniform(ks[4], (N_hid, N_hid), minval=-0.5, maxval=0.5, dtype=f32)
    b2 = jax.random.uniform(ks[5], (1, N_hid), minval=-bias_scale, maxval=bias_scale, dtype=f32)
    params = (win1, a1, b1, win2, a2, b2)

    x = jax.random.uniform(ks[6], (batch, frames, N_in), minval=-1.0, maxval=1.0, dtype=f32)
    mem0 = jax.random.uniform(ks[7], (2, batch, N_hid),
                              minval=-mem_init, maxval=mem_init, dtype=f32)

    packed = pack_params(params)                       # one-time static param packing
    packed = jax.tree_util.tree_map(jax.block_until_ready, packed)

    mems, spikes = multirc_forward(x, mem0, packed, alpha=alpha, decay=decay, thr=thr)
    jax.block_until_ready((mems, spikes))

    assert mems.shape == (2, batch, frames + 1, N_hid)
    assert spikes.shape == (2, batch, frames + 1, N_hid)

    ref_mems, ref_spikes = multirc_reference(x, mem0, params,
                                             alpha=alpha, decay=decay, thr=thr)

    spike_mismatch = jnp.abs(spikes - ref_spikes)
    if float(jnp.sum(spike_mismatch)) == 0.0:
        max_diff = float(jnp.max(jnp.abs(mems - ref_mems)))
        assert max_diff < 1e-3, f"membrane mismatch vs reference: {max_diff}"
    else:
        # Spikes are binary: a legitimate flip can only happen when the reference
        # membrane sits within float noise of the threshold at the FIRST step where
        # the trains diverge (after which differences cascade).  Any flip with a
        # larger threshold margin is a real bug.
        flip_per_t = jnp.any(spike_mismatch > 0, axis=(0, 1, 3))          # (frames+1,)
        first_t = int(jnp.argmax(flip_per_t))
        flips_at_first = spike_mismatch[:, :, first_t, :] > 0
        margins = jnp.where(flips_at_first,
                            jnp.abs(ref_mems[:, :, first_t, :] - thr), 0.0)
        worst = float(jnp.max(margins))
        assert worst < 1e-3, (
            f"spike mismatch at t={first_t} not explained by threshold noise "
            f"(margin={worst})")
        # Pre-divergence membranes must still agree tightly.
        if first_t > 0:
            pre_diff = float(jnp.max(jnp.abs(mems[:, :, :first_t, :]
                                             - ref_mems[:, :, :first_t, :])))
            assert pre_diff < 1e-3, f"pre-divergence membrane mismatch: {pre_diff}"

    print("KERNEL_OK")
</pallas_src>

<mosaic_0001>
module attributes {stable_mosaic.version = 11 : i64} {
  func.func @_multirc_kernel(%arg0: memref<48x16xf32, #tpu.memory_space<vmem>>, %arg1: memref<16x256xf32, #tpu.memory_space<vmem>>, %arg2: memref<1x256xf32, #tpu.memory_space<vmem>>, %arg3: memref<256x256xf32, #tpu.memory_space<vmem>>, %arg4: memref<8x256xf32, #tpu.memory_space<vmem>>, %arg5: memref<7x8x256xf32, #tpu.memory_space<vmem>>, %arg6: memref<7x8x256xf32, #tpu.memory_space<vmem>>) attributes {dimension_semantics = [], scalar_prefetch = 0 : i64, scratch_operands = 0 : i64, tpu.core_type = #tpu.core_type<tc>} {
    %c0 = arith.constant 0 : index
    %c0_0 = arith.constant 0 : index
    %0 = vector.load %arg0[%c0, %c0_0] : memref<48x16xf32, #tpu.memory_space<vmem>>, vector<48x16xf32>
    %c0_1 = arith.constant 0 : index
    %c0_2 = arith.constant 0 : index
    %1 = vector.load %arg1[%c0_1, %c0_2] : memref<16x256xf32, #tpu.memory_space<vmem>>, vector<16x256xf32>
    %cst = arith.constant dense<0.000000e+00> : vector<48x256xf32>
    %2 = tpu.matmul %0, %1, %cst {dimension_numbers = #tpu.dot_dimension_numbers<[1], [0], [0], [1], [0, 0, 1, 1], [], []>} : vector<48x16xf32>, vector<16x256xf32>, vector<48x256xf32> -> vector<48x256xf32>
    %c0_3 = arith.constant 0 : index
    %c0_4 = arith.constant 0 : index
    %3 = vector.load %arg2[%c0_3, %c0_4] : memref<1x256xf32, #tpu.memory_space<vmem>>, vector<1x256xf32>
    %4 = vector.broadcast %3 : vector<1x256xf32> to vector<48x256xf32>
    %5 = arith.addf %2, %4 : vector<48x256xf32>
    %cst_5 = arith.constant 5.000000e-01 : f32
    %6 = vector.broadcast %cst_5 : f32 to vector<48x256xf32>
    %7 = arith.mulf %6, %5 : vector<48x256xf32>
    %c0_6 = arith.constant 0 : index
    %c0_7 = arith.constant 0 : index
    %8 = vector.load %arg4[%c0_6, %c0_7] : memref<8x256xf32, #tpu.memory_space<vmem>>, vector<8x256xf32>
    %cst_8 = arith.constant 0.000000e+00 : f32
    %9 = vector.broadcast %cst_8 : f32 to vector<8x256xf32>
    %c0_9 = arith.constant 0 : index
    %c0_10 = arith.constant 0 : index
    %c0_11 = arith.constant 0 : index
    %10 = vector.load %arg5[%c0_9, %c0_10, %c0_11] : memref<7x8x256xf32, #tpu.memory_space<vmem>>, vector<1x8x256xf32>
    %11 = vector.shape_cast %10 : vector<1x8x256xf32> to vector<8x256xf32>
    %12 = vector.shape_cast %8 : vector<8x256xf32> to vector<1x8x256xf32>
    tpu.vector_store %arg5[%c0_9, %c0_10, %c0_11], %12 {strides = array<i32>} : memref<7x8x256xf32, #tpu.memory_space<vmem>>, vector<1x8x256xf32>,
    %c0_12 = arith.constant 0 : index
    %c0_13 = arith.constant 0 : index
    %c0_14 = arith.constant 0 : index
    %13 = vector.load %arg6[%c0_12, %c0_13, %c0_14] : memref<7x8x256xf32, #tpu.memory_space<vmem>>, vector<1x8x256xf32>
    %14 = vector.shape_cast %13 : vector<1x8x256xf32> to vector<8x256xf32>
    %15 = vector.shape_cast %9 : vector<8x256xf32> to vector<1x8x256xf32>
    tpu.vector_store %arg6[%c0_12, %c0_13, %c0_14], %15 {strides = array<i32>} : memref<7x8x256xf32, #tpu.memory_space<vmem>>, vector<1x8x256xf32>,
    %16 = vector.extract_strided_slice %7 {offsets = [0, 0], sizes = [8, 256], strides = [1, 1]} : vector<48x256xf32> to vector<8x256xf32>
    %c0_15 = arith.constant 0 : index
    %c0_16 = arith.constant 0 : index
    %17 = vector.load %arg3[%c0_15, %c0_16] : memref<256x256xf32, #tpu.memory_space<vmem>>, vector<256x256xf32>
    %cst_17 = arith.constant dense<0.000000e+00> : vector<8x256xf32>
    %18 = tpu.matmul %9, %17, %cst_17 {dimension_numbers = #tpu.dot_dimension_numbers<[1], [0], [0], [1], [0, 0, 1, 1], [], []>} : vector<8x256xf32>, vector<256x256xf32>, vector<8x256xf32> -> vector<8x256xf32>
    %cst_18 = arith.constant 5.000000e-01 : f32
    %19 = vector.broadcast %cst_18 : f32 to vector<8x256xf32>
    %20 = arith.mulf %19, %18 : vector<8x256xf32>
    %21 = arith.addf %20, %16 : vector<8x256xf32>
    %22 = math.tanh %21 : vector<8x256xf32>
    %cst_19 = arith.constant 5.000000e-01 : f32
    %23 = vector.broadcast %cst_19 : f32 to vector<8x256xf32>
    %24 = arith.mulf %8, %23 : vector<8x256xf32>
    %cst_20 = arith.constant 1.000000e+00 : f32
    %25 = vector.broadcast %cst_20 : f32 to vector<8x256xf32>
    %26 = arith.subf %25, %9 : vector<8x256xf32>
    %cst_21 = arith.constant 5.000000e-01 : f32
    %27 = vector.broadcast %cst_21 : f32 to vector<8x256xf32>
    %28 = arith.mulf %27, %26 : vector<8x256xf32>
    %29 = arith.subf %24, %28 : vector<8x256xf32>
    %30 = arith.addf %29, %22 : vector<8x256xf32>
    %cst_22 = arith.constant 5.000000e-01 : f32
    %31 = vector.broadcast %cst_22 : f32 to vector<8x256xf32>
    %32 = arith.cmpf ogt, %30, %31 : vector<8x256xf32>
    %33 = arith.extui %32 : vector<8x256xi1> to vector<8x256xi32>
    %34 = arith.sitofp %33 : vector<8x256xi32> to vector<8x256xf32>
    %c1 = arith.constant 1 : index
    %c0_23 = arith.constant 0 : index
    %c0_24 = arith.constant 0 : index
    %35 = vector.load %arg5[%c1, %c0_23, %c0_24] : memref<7x8x256xf32, #tpu.memory_space<vmem>>, vector<1x8x256xf32>
    %36 = vector.shape_cast %35 : vector<1x8x256xf32> to vector<8x256xf32>
    %37 = vector.shape_cast %30 : vector<8x256xf32> to vector<1x8x256xf32>
    tpu.vector_store %arg5[%c1, %c0_23, %c0_24], %37 {strides = array<i32>} : memref<7x8x256xf32, #tpu.memory_space<vmem>>, vector<1x8x256xf32>,
    %c1_25 = arith.constant 1 : index
    %c0_26 = arith.constant 0 : index
    %c0_27 = arith.constant 0 : index
    %38 = vector.load %arg6[%c1_25, %c0_26, %c0_27] : memref<7x8x256xf32, #tpu.memory_space<vmem>>, vector<1x8x256xf32>
    %39 = vector.shape_cast %38 : vector<1x8x256xf32> to vector<8x256xf32>
    %40 = vector.shape_cast %34 : vector<8x256xf32> to vector<1x8x256xf32>
    tpu.vector_store %arg6[%c1_25, %c0_26, %c0_27], %40 {strides = array<i32>} : memref<7x8x256xf32, #tpu.memory_space<vmem>>, vector<1x8x256xf32>,
    %41 = vector.extract_strided_slice %7 {offsets = [8, 0], sizes = [8, 256], strides = [1, 1]} : vector<48x256xf32> to vector<8x256xf32>
    %c0_28 = arith.constant 0 : index
    %c0_29 = arith.constant 0 : index
    %42 = vector.load %arg3[%c0_28, %c0_29] : memref<256x256xf32, #tpu.memory_space<vmem>>, vector<256x256xf32>
    %cst_30 = arith.constant dense<0.000000e+00> : vector<8x256xf32>
    %43 = tpu.matmul %34, %42, %cst_30 {dimension_numbers = #tpu.dot_dimension_numbers<[1], [0], [0], [1], [0, 0, 1, 1], [], []>} : vector<8x256xf32>, vector<256x256xf32>, vector<8x256xf32> -> vector<8x256xf32>
    %cst_31 = arith.constant 5.000000e-01 : f32
    %44 = vector.broadcast %cst_31 : f32 to vector<8x256xf32>
    %45 = arith.mulf %44, %43 : vector<8x256xf32>
    %46 = arith.addf %45, %41 : vector<8x256xf32>
    %47 = math.tanh %46 : vector<8x256xf32>
    %cst_32 = arith.constant 5.000000e-01 : f32
    %48 = vector.broadcast %cst_32 : f32 to vector<8x256xf32>
    %49 = arith.mulf %30, %48 : vector<8x256xf32>
    %cst_33 = arith.constant 1.000000e+00 : f32
    %50 = vector.broadcast %cst_33 : f32 to vector<8x256xf32>
    %51 = arith.subf %50, %34 : vector<8x256xf32>
    %cst_34 = arith.constant 5.000000e-01 : f32
    %52 = vector.broadcast %cst_34 : f32 to vector<8x256xf32>
    %53 = arith.mulf %52, %51 : vector<8x256xf32>
    %54 = arith.subf %49, %53 : vector<8x256xf32>
    %55 = arith.addf %54, %47 : vector<8x256xf32>
    %cst_35 = arith.constant 5.000000e-01 : f32
    %56 = vector.broadcast %cst_35 : f32 to vector<8x256xf32>
    %57 = arith.cmpf ogt, %55, %56 : vector<8x256xf32>
    %58 = arith.extui %57 : vector<8x256xi1> to vector<8x256xi32>
    %59 = arith.sitofp %58 : vector<8x256xi32> to vector<8x256xf32>
    %c2 = arith.constant 2 : index
    %c0_36 = arith.constant 0 : index
    %c0_37 = arith.constant 0 : index
    %60 = vector.load %arg5[%c2, %c0_36, %c0_37] : memref<7x8x256xf32, #tpu.memory_space<vmem>>, vector<1x8x256xf32>
    %61 = vector.shape_cast %60 : vector<1x8x256xf32> to vector<8x256xf32>
    %62 = vector.shape_cast %55 : vector<8x256xf32> to vector<1x8x256xf32>
    tpu.vector_store %arg5[%c2, %c0_36, %c0_37], %62 {strides = array<i32>} : memref<7x8x256xf32, #tpu.memory_space<vmem>>, vector<1x8x256xf32>,
    %c2_38 = arith.constant 2 : index
    %c0_39 = arith.constant 0 : index
    %c0_40 = arith.constant 0 : index
    %63 = vector.load %arg6[%c2_38, %c0_39, %c0_40] : memref<7x8x256xf32, #tpu.memory_space<vmem>>, vector<1x8x256xf32>
    %64 = vector.shape_cast %63 : vector<1x8x256xf32> to vector<8x256xf32>
    %65 = vector.shape_cast %59 : vector<8x256xf32> to vector<1x8x256xf32>
    tpu.vector_store %arg6[%c2_38, %c0_39, %c0_40], %65 {strides = array<i32>} : memref<7x8x256xf32, #tpu.memory_space<vmem>>, vector<1x8x256xf32>,
    %66 = vector.extract_strided_slice %7 {offsets = [16, 0], sizes = [8, 256], strides = [1, 1]} : vector<48x256xf32> to vector<8x256xf32>
    %c0_41 = arith.constant 0 : index
    %c0_42 = arith.constant 0 : index
    %67 = vector.load %arg3[%c0_41, %c0_42] : memref<256x256xf32, #tpu.memory_space<vmem>>, vector<256x256xf32>
    %cst_43 = arith.constant dense<0.000000e+00> : vector<8x256xf32>
    %68 = tpu.matmul %59, %67, %cst_43 {dimension_numbers = #tpu.dot_dimension_numbers<[1], [0], [0], [1], [0, 0, 1, 1], [], []>} : vector<8x256xf32>, vector<256x256xf32>, vector<8x256xf32> -> vector<8x256xf32>
    %cst_44 = arith.constant 5.000000e-01 : f32
    %69 = vector.broadcast %cst_44 : f32 to vector<8x256xf32>
    %70 = arith.mulf %69, %68 : vector<8x256xf32>
    %71 = arith.addf %70, %66 : vector<8x256xf32>
    %72 = math.tanh %71 : vector<8x256xf32>
    %cst_45 = arith.constant 5.000000e-01 : f32
    %73 = vector.broadcast %cst_45 : f32 to vector<8x256xf32>
    %74 = arith.mulf %55, %73 : vector<8x256xf32>
    %cst_46 = arith.constant 1.000000e+00 : f32
    %75 = vector.broadcast %cst_46 : f32 to vector<8x256xf32>
    %76 = arith.subf %75, %59 : vector<8x256xf32>
    %cst_47 = arith.constant 5.000000e-01 : f32
    %77 = vector.broadcast %cst_47 : f32 to vector<8x256xf32>
    %78 = arith.mulf %77, %76 : vector<8x256xf32>
    %79 = arith.subf %74, %78 : vector<8x256xf32>
    %80 = arith.addf %79, %72 : vector<8x256xf32>
    %cst_48 = arith.constant 5.000000e-01 : f32
    %81 = vector.broadcast %cst_48 : f32 to vector<8x256xf32>
    %82 = arith.cmpf ogt, %80, %81 : vector<8x256xf32>
    %83 = arith.extui %82 : vector<8x256xi1> to vector<8x256xi32>
    %84 = arith.sitofp %83 : vector<8x256xi32> to vector<8x256xf32>
    %c3 = arith.constant 3 : index
    %c0_49 = arith.constant 0 : index
    %c0_50 = arith.constant 0 : index
    %85 = vector.load %arg5[%c3, %c0_49, %c0_50] : memref<7x8x256xf32, #tpu.memory_space<vmem>>, vector<1x8x256xf32>
    %86 = vector.shape_cast %85 : vector<1x8x256xf32> to vector<8x256xf32>
    %87 = vector.shape_cast %80 : vector<8x256xf32> to vector<1x8x256xf32>
    tpu.vector_store %arg5[%c3, %c0_49, %c0_50], %87 {strides = array<i32>} : memref<7x8x256xf32, #tpu.memory_space<vmem>>, vector<1x8x256xf32>,
    %c3_51 = arith.constant 3 : index
    %c0_52 = arith.constant 0 : index
    %c0_53 = arith.constant 0 : index
    %88 = vector.load %arg6[%c3_51, %c0_52, %c0_53] : memref<7x8x256xf32, #tpu.memory_space<vmem>>, vector<1x8x256xf32>
    %89 = vector.shape_cast %88 : vector<1x8x256xf32> to vector<8x256xf32>
    %90 = vector.shape_cast %84 : vector<8x256xf32> to vector<1x8x256xf32>
    tpu.vector_store %arg6[%c3_51, %c0_52, %c0_53], %90 {strides = array<i32>} : memref<7x8x256xf32, #tpu.memory_space<vmem>>, vector<1x8x256xf32>,
    %91 = vector.extract_strided_slice %7 {offsets = [24, 0], sizes = [8, 256], strides = [1, 1]} : vector<48x256xf32> to vector<8x256xf32>
    %c0_54 = arith.constant 0 : index
    %c0_55 = arith.constant 0 : index
    %92 = vector.load %arg3[%c0_54, %c0_55] : memref<256x256xf32, #tpu.memory_space<vmem>>, vector<256x256xf32>
    %cst_56 = arith.constant dense<0.000000e+00> : vector<8x256xf32>
    %93 = tpu.matmul %84, %92, %cst_56 {dimension_numbers = #tpu.dot_dimension_numbers<[1], [0], [0], [1], [0, 0, 1, 1], [], []>} : vector<8x256xf32>, vector<256x256xf32>, vector<8x256xf32> -> vector<8x256xf32>
    %cst_57 = arith.constant 5.000000e-01 : f32
    %94 = vector.broadcast %cst_57 : f32 to vector<8x256xf32>
    %95 = arith.mulf %94, %93 : vector<8x256xf32>
    %96 = arith.addf %95, %91 : vector<8x256xf32>
    %97 = math.tanh %96 : vector<8x256xf32>
    %cst_58 = arith.constant 5.000000e-01 : f32
    %98 = vector.broadcast %cst_58 : f32 to vector<8x256xf32>
    %99 = arith.mulf %80, %98 : vector<8x256xf32>
    %cst_59 = arith.constant 1.000000e+00 : f32
    %100 = vector.broadcast %cst_59 : f32 to vector<8x256xf32>
    %101 = arith.subf %100, %84 : vector<8x256xf32>
    %cst_60 = arith.constant 5.000000e-01 : f32
    %102 = vector.broadcast %cst_60 : f32 to vector<8x256xf32>
    %103 = arith.mulf %102, %101 : vector<8x256xf32>
    %104 = arith.subf %99, %103 : vector<8x256xf32>
    %105 = arith.addf %104, %97 : vector<8x256xf32>
    %cst_61 = arith.constant 5.000000e-01 : f32
    %106 = vector.broadcast %cst_61 : f32 to vector<8x256xf32>
    %107 = arith.cmpf ogt, %105, %106 : vector<8x256xf32>
    %108 = arith.extui %107 : vector<8x256xi1> to vector<8x256xi32>
    %109 = arith.sitofp %108 : vector<8x256xi32> to vector<8x256xf32>
    %c4 = arith.constant 4 : index
    %c0_62 = arith.constant 0 : index
    %c0_63 = arith.constant 0 : index
    %110 = vector.load %arg5[%c4, %c0_62, %c0_63] : memref<7x8x256xf32, #tpu.memory_space<vmem>>, vector<1x8x256xf32>
    %111 = vector.shape_cast %110 : vector<1x8x256xf32> to vector<8x256xf32>
    %112 = vector.shape_cast %105 : vector<8x256xf32> to vector<1x8x256xf32>
    tpu.vector_store %arg5[%c4, %c0_62, %c0_63], %112 {strides = array<i32>} : memref<7x8x256xf32, #tpu.memory_space<vmem>>, vector<1x8x256xf32>,
    %c4_64 = arith.constant 4 : index
    %c0_65 = arith.constant 0 : index
    %c0_66 = arith.constant 0 : index
    %113 = vector.load %arg6[%c4_64, %c0_65, %c0_66] : memref<7x8x256xf32, #tpu.memory_space<vmem>>, vector<1x8x256xf32>
    %114 = vector.shape_cast %113 : vector<1x8x256xf32> to vector<8x256xf32>
    %115 = vector.shape_cast %109 : vector<8x256xf32> to vector<1x8x256xf32>
    tpu.vector_store %arg6[%c4_64, %c0_65, %c0_66], %115 {strides = array<i32>} : memref<7x8x256xf32, #tpu.memory_space<vmem>>, vector<1x8x256xf32>,
    %116 = vector.extract_strided_slice %7 {offsets = [32, 0], sizes = [8, 256], strides = [1, 1]} : vector<48x256xf32> to vector<8x256xf32>
    %c0_67 = arith.constant 0 : index
    %c0_68 = arith.constant 0 : index
    %117 = vector.load %arg3[%c0_67, %c0_68] : memref<256x256xf32, #tpu.memory_space<vmem>>, vector<256x256xf32>
    %cst_69 = arith.constant dense<0.000000e+00> : vector<8x256xf32>
    %118 = tpu.matmul %109, %117, %cst_69 {dimension_numbers = #tpu.dot_dimension_numbers<[1], [0], [0], [1], [0, 0, 1, 1], [], []>} : vector<8x256xf32>, vector<256x256xf32>, vector<8x256xf32> -> vector<8x256xf32>
    %cst_70 = arith.constant 5.000000e-01 : f32
    %119 = vector.broadcast %cst_70 : f32 to vector<8x256xf32>
    %120 = arith.mulf %119, %118 : vector<8x256xf32>
    %121 = arith.addf %120, %116 : vector<8x256xf32>
    %122 = math.tanh %121 : vector<8x256xf32>
    %cst_71 = arith.constant 5.000000e-01 : f32
    %123 = vector.broadcast %cst_71 : f32 to vector<8x256xf32>
    %124 = arith.mulf %105, %123 : vector<8x256xf32>
    %cst_72 = arith.constant 1.000000e+00 : f32
    %125 = vector.broadcast %cst_72 : f32 to vector<8x256xf32>
    %126 = arith.subf %125, %109 : vector<8x256xf32>
    %cst_73 = arith.constant 5.000000e-01 : f32
    %127 = vector.broadcast %cst_73 : f32 to vector<8x256xf32>
    %128 = arith.mulf %127, %126 : vector<8x256xf32>
    %129 = arith.subf %124, %128 : vector<8x256xf32>
    %130 = arith.addf %129, %122 : vector<8x256xf32>
    %cst_74 = arith.constant 5.000000e-01 : f32
    %131 = vector.broadcast %cst_74 : f32 to vector<8x256xf32>
    %132 = arith.cmpf ogt, %130, %131 : vector<8x256xf32>
    %133 = arith.extui %132 : vector<8x256xi1> to vector<8x256xi32>
    %134 = arith.sitofp %133 : vector<8x256xi32> to vector<8x256xf32>
    %c5 = arith.constant 5 : index
    %c0_75 = arith.constant 0 : index
    %c0_76 = arith.constant 0 : index
    %135 = vector.load %arg5[%c5, %c0_75, %c0_76] : memref<7x8x256xf32, #tpu.memory_space<vmem>>, vector<1x8x256xf32>
    %136 = vector.shape_cast %135 : vector<1x8x256xf32> to vector<8x256xf32>
    %137 = vector.shape_cast %130 : vector<8x256xf32> to vector<1x8x256xf32>
    tpu.vector_store %arg5[%c5, %c0_75, %c0_76], %137 {strides = array<i32>} : memref<7x8x256xf32, #tpu.memory_space<vmem>>, vector<1x8x256xf32>,
    %c5_77 = arith.constant 5 : index
    %c0_78 = arith.constant 0 : index
    %c0_79 = arith.constant 0 : index
    %138 = vector.load %arg6[%c5_77, %c0_78, %c0_79] : memref<7x8x256xf32, #tpu.memory_space<vmem>>, vector<1x8x256xf32>
    %139 = vector.shape_cast %138 : vector<1x8x256xf32> to vector<8x256xf32>
    %140 = vector.shape_cast %134 : vector<8x256xf32> to vector<1x8x256xf32>
    tpu.vector_store %arg6[%c5_77, %c0_78, %c0_79], %140 {strides = array<i32>} : memref<7x8x256xf32, #tpu.memory_space<vmem>>, vector<1x8x256xf32>,
    %141 = vector.extract_strided_slice %7 {offsets = [40, 0], sizes = [8, 256], strides = [1, 1]} : vector<48x256xf32> to vector<8x256xf32>
    %c0_80 = arith.constant 0 : index
    %c0_81 = arith.constant 0 : index
    %142 = vector.load %arg3[%c0_80, %c0_81] : memref<256x256xf32, #tpu.memory_space<vmem>>, vector<256x256xf32>
    %cst_82 = arith.constant dense<0.000000e+00> : vector<8x256xf32>
    %143 = tpu.matmul %134, %142, %cst_82 {dimension_numbers = #tpu.dot_dimension_numbers<[1], [0], [0], [1], [0, 0, 1, 1], [], []>} : vector<8x256xf32>, vector<256x256xf32>, vector<8x256xf32> -> vector<8x256xf32>
    %cst_83 = arith.constant 5.000000e-01 : f32
    %144 = vector.broadcast %cst_83 : f32 to vector<8x256xf32>
    %145 = arith.mulf %144, %143 : vector<8x256xf32>
    %146 = arith.addf %145, %141 : vector<8x256xf32>
    %147 = math.tanh %146 : vector<8x256xf32>
    %cst_84 = arith.constant 5.000000e-01 : f32
    %148 = vector.broadcast %cst_84 : f32 to vector<8x256xf32>
    %149 = arith.mulf %130, %148 : vector<8x256xf32>
    %cst_85 = arith.constant 1.000000e+00 : f32
    %150 = vector.broadcast %cst_85 : f32 to vector<8x256xf32>
    %151 = arith.subf %150, %134 : vector<8x256xf32>
    %cst_86 = arith.constant 5.000000e-01 : f32
    %152 = vector.broadcast %cst_86 : f32 to vector<8x256xf32>
    %153 = arith.mulf %152, %151 : vector<8x256xf32>
    %154 = arith.subf %149, %153 : vector<8x256xf32>
    %155 = arith.addf %154, %147 : vector<8x256xf32>
    %cst_87 = arith.constant 5.000000e-01 : f32
    %156 = vector.broadcast %cst_87 : f32 to vector<8x256xf32>
    %157 = arith.cmpf ogt, %155, %156 : vector<8x256xf32>
    %158 = arith.extui %157 : vector<8x256xi1> to vector<8x256xi32>
    %159 = arith.sitofp %158 : vector<8x256xi32> to vector<8x256xf32>
    %c6 = arith.constant 6 : index
    %c0_88 = arith.constant 0 : index
    %c0_89 = arith.constant 0 : index
    %160 = vector.load %arg5[%c6, %c0_88, %c0_89] : memref<7x8x256xf32, #tpu.memory_space<vmem>>, vector<1x8x256xf32>
    %161 = vector.shape_cast %160 : vector<1x8x256xf32> to vector<8x256xf32>
    %162 = vector.shape_cast %155 : vector<8x256xf32> to vector<1x8x256xf32>
    tpu.vector_store %arg5[%c6, %c0_88, %c0_89], %162 {strides = array<i32>} : memref<7x8x256xf32, #tpu.memory_space<vmem>>, vector<1x8x256xf32>,
    %c6_90 = arith.constant 6 : index
    %c0_91 = arith.constant 0 : index
    %c0_92 = arith.constant 0 : index
    %163 = vector.load %arg6[%c6_90, %c0_91, %c0_92] : memref<7x8x256xf32, #tpu.memory_space<vmem>>, vector<1x8x256xf32>
    %164 = vector.shape_cast %163 : vector<1x8x256xf32> to vector<8x256xf32>
    %165 = vector.shape_cast %159 : vector<8x256xf32> to vector<1x8x256xf32>
    tpu.vector_store %arg6[%c6_90, %c0_91, %c0_92], %165 {strides = array<i32>} : memref<7x8x256xf32, #tpu.memory_space<vmem>>, vector<1x8x256xf32>,
    return
  }
}

</mosaic_0001>

<llo_original>
// kernel: multirc_forward.1
$region0: #{multirc_forward.1}
  #allocation0 [shape = 'u32[]', space=smem, size = 0x4, offset = 0x4, fixed_abs, tag = 'smem constant byte address 0x4 - core index']
  #allocation1 [shape = 'u32[144,128]{1,0:T(1,128)}', space=vmem, size = 0x12000, scoped, tag = 'internal scratch']
  %s0 = inlined_call_operand.vmem [shape: f32[48,16], index: 0, kind: input, shape index: {}]
  %s1 = inlined_call_operand.vmem [shape: f32[16,256], index: 1, kind: input, shape index: {}]
  %s2 = inlined_call_operand.vmem [shape: f32[1,256], index: 2, kind: input, shape index: {}]
  %s3 = inlined_call_operand.hbm [shape: f32[256,256], index: 3, kind: input, shape index: {}]
  %s4 = inlined_call_operand.vmem [shape: f32[8,256], index: 4, kind: input, shape index: {}]
  %s5 = inlined_call_operand.vmem [shape: f32[7,8,256], index: 5, kind: output, shape index: {0}]
  %s6 = inlined_call_operand.vmem [shape: f32[7,8,256], index: 6, kind: output, shape index: {1}]
  %7 = xla_tuple %s5, %s6
  %s8 = sld [smem:[#allocation0]]
  $region42: #{multirc_forward.1} parent=0
    _
  %s10 = ssub.s32 1, %s8
  %s11 = scalar_select 0, %s10, %s8
  $region1: #{multirc_forward.1} parent=0
    #allocation2 [shape = 'u8[262144]{0}', space=vmem, size = 0x40000, scoped, tag = 'input window, operand 3, single buffered']
    #allocation3 [shape = 's32[1]{0}', space=sflag, size = 0x4, scoped, tag = 'scoped memory for multirc_forward.1']
    %12 = vsyncpa [#allocation3], 0
    // Predicated region
    $region2: #{multirc_forward.1} parent=1 // pred_check
      _
    $region3: #{multirc_forward.1} parent=1 // pred_check_branch
      %14 = sbr.rel (0) target = $region5
    $region4: #{multirc_forward.1} parent=1 // pred_region
      _
    $region5: #{multirc_forward.1} parent=1 // pred_fallthru
      _
    // Predicated region
    $region6: #{multirc_forward.1} parent=1 // pred_check
      _
    $region7: #{multirc_forward.1} parent=1 // pred_check_branch
      %16 = sbr.rel (0) target = $region9
    $region8: #{multirc_forward.1} parent=1 // pred_region
      _
    $region9: #{multirc_forward.1} parent=1 // pred_fallthru
      _
    // Predicated region
    $region10: #{multirc_forward.1} parent=1 // pred_check
      _
    $region11: #{multirc_forward.1} parent=1 // pred_check_branch
      %18 = sbr.rel (0) target = $region13
    $region12: #{multirc_forward.1} parent=1 // pred_region
      _
    $region13: #{multirc_forward.1} parent=1 // pred_fallthru
      _
    // Predicated region
    $region14: #{multirc_forward.1} parent=1 // pred_check
      _
    $region15: #{multirc_forward.1} parent=1 // pred_check_branch
      %20 = sbr.rel (0) target = $region17
    $region16: #{multirc_forward.1} parent=1 // pred_region
      %s22 = ssub.s32 8192, 8192
      %23 = vsyncadd [#allocation3], %s22
      %s24 = sshll.u32 [#allocation2], 4
      %s25 = int_to_ptr.vmem [resolvable:$true] %s24
      %30 = dma.hbm_to_vmem [thread:$0]  %s3, 8192, %s25, [#allocation3], 256, 256, 16
    $region17: #{multirc_forward.1} parent=1 // pred_fallthru
      _
    // Predicated region
    $region18: #{multirc_forward.1} parent=1 // pred_check
      _
    $region19: #{multirc_forward.1} parent=1 // pred_check_branch
      %32 = sbr.rel (0) target = $region21
    $region20: #{multirc_forward.1} parent=1 // pred_region
      _
    $region21: #{multirc_forward.1} parent=1 // pred_fallthru
      _
    // Predicated region
    $region22: #{multirc_forward.1} parent=1 // pred_check
      _
    $region23: #{multirc_forward.1} parent=1 // pred_check_branch
      %34 = sbr.rel (0) target = $region25
    $region24: #{multirc_forward.1} parent=1 // pred_region
      %35 = dma.done [#allocation3], 8192
    $region25: #{multirc_forward.1} parent=1 // pred_fallthru
      _
    %v36 = vld [vmem:[%s0] sm:$0xff]
    %v37 = vld [vmem:[%s0 + $0x8] sm:$0xff]
    %v38 = vld [vmem:[%s0 + $0x10] sm:$0xff]
    %v39 = vld [vmem:[%s0 + $0x18] sm:$0xff]
    %v40 = vld [vmem:[%s0 + $0x20] sm:$0xff]
    %v41 = vld [vmem:[%s0 + $0x28] sm:$0xff]
    %v42 = vld [vmem:[%s1] sm:$0xff]
    %v43 = vld [vmem:[%s1 + $0x8] sm:$0xff]
    %v44 = vld [vmem:[%s1 + $0x10] sm:$0xff]
    %v45 = vld [vmem:[%s1 + $0x18] sm:$0xff]
    %v46 = vld [vmem:[%s2] sm:$0x3]
    %v48 = vlaneseq
    %v49 = vshrl.u32 %v48, 7
    %v50 = vsub.s32 0, %v49
    %v51 = vrot.slane %v46, %v50
    %v52 = vlaneseq
    %v53 = vshrl.u32 %v52, 7
    %v54 = vsub.s32 1, %v53
    %v55 = vrot.slane %v46, %v54
    %vm58 = vcmask 130048
    %v60 = vsel %vm58, %v36, 0
    %v63 = vsel %vm58, %v37, 0
    %v66 = vsel %vm58, %v38, 0
    %v69 = vsel %vm58, %v39, 0
    %v72 = vsel %vm58, %v40, 0
    %v75 = vsel %vm58, %v41, 0
    %77 = vmatprep.subr.mxu0 %v43
    %78 = vmatpush1.msra.mxu0 %v42
    %79 = vmatprep.subr.mxu0 %v45
    %80 = vmatpush1.msra.mxu0 %v44
    %81 = vmatprep.subr.mxu0 0.0
    %82 = vmatpush1.msra.mxu0 0.0
    %83 = vmatprep.subr.mxu0 0.0
    %84 = vmatpush1.msra.mxu0 0.0
    %85 = vmatprep.subr.mxu0 0.0
    %86 = vmatpush1.msra.mxu0 0.0
    %87 = vmatprep.subr.mxu0 0.0
    %88 = vmatpush1.msra.mxu0 0.0
    %89 = vmatprep.subr.mxu0 0.0
    %90 = vmatpush1.msra.mxu0 0.0
    %91 = vmatprep.subr.mxu0 0.0
    %92 = vmatpush1.msra.mxu0 0.0
    %93 = vmatprep.subr.mxu0 0.0
    %94 = vmatpush1.msra.mxu0 0.0
    %95 = vmatprep.subr.mxu0 0.0
    %96 = vmatpush1.msra.mxu0 0.0
    %97 = vmatprep.subr.mxu0 0.0
    %98 = vmatpush1.msra.mxu0 0.0
    %99 = vmatprep.subr.mxu0 0.0
    %100 = vmatpush1.msra.mxu0 0.0
    %101 = vmatprep.subr.mxu0 0.0
    %102 = vmatpush1.msra.mxu0 0.0
    %103 = vmatprep.subr.mxu0 0.0
    %104 = vmatpush1.msra.mxu0 0.0
    %105 = vmatprep.subr.mxu0 0.0
    %106 = vmatpush1.msra.mxu0 0.0
    %107 = vmatprep.subr.mxu0 0.0
    %108 = vmatpush1.msra.mxu0 0.0
    %109 = vmatprep.subr.mxu0 0.0
    %110 = vmatpush1.msra.mxu0 0.0
    %111 = vmatprep.subr.mxu0 0.0
    %112 = vmatpush1.msra.mxu0 0.0
    %113 = vmatprep.subr.mxu0 0.0
    %114 = vmatpush1.msra.mxu0 0.0
    %115 = vmatprep.subr.mxu0 0.0
    %116 = vmatpush1.msra.mxu0 0.0
    %117 = vmatprep.subr.mxu0 0.0
    %118 = vmatpush1.msra.mxu0 0.0
    %119 = vmatprep.subr.mxu0 0.0
    %120 = vmatpush1.msra.mxu0 0.0
    %121 = vmatprep.subr.mxu0 0.0
    %122 = vmatpush1.msra.mxu0 0.0
    %123 = vmatprep.subr.mxu0 0.0
    %124 = vmatpush1.msra.mxu0 0.0
    %125 = vmatprep.subr.mxu0 0.0
    %126 = vmatpush1.msra.mxu0 0.0
    %127 = vmatprep.subr.mxu0 0.0
    %128 = vmatpush1.msra.mxu0 0.0
    %129 = vmatprep.subr.mxu0 0.0
    %130 = vmatpush1.msra.mxu0 0.0
    %131 = vmatprep.subr.mxu0 0.0
    %132 = vmatpush1.msra.mxu0 0.0
    %133 = vmatprep.subr.mxu0 0.0
    %134 = vmatpush1.msra.mxu0 0.0
    %135 = vmatprep.subr.mxu0 0.0
    %136 = vmatpush1.msra.mxu0 0.0
    %137 = vmatprep.subr.mxu0 0.0
    %138 = vmatpush1.msra.mxu0 0.0
    %139 = vmatprep.subr.mxu0 0.0
    %140 = vmatpush1.msra.mxu0 0.0
    %141 = vmatprep.mubr.f32.mxu0 0.0
    %142 = vmatmul.mubr.f32.gmra.mrb[0].mxu0 %v60
    %v143 = vpop.f32.mrb[0].mxu0
    %v144 = vadd.f32 %v51, %v143
    %v145 = vpop.f32.mrb[0].mxu0
    %v146 = vadd.f32 %v55, %v145
    %147 = vmatprep.mubr.f32.mxu0 0.0
    %148 = vmatmul.mubr.f32.gmra.mrb[0].mxu0 %v63
    %v149 = vpop.f32.mrb[0].mxu0
    %v150 = vadd.f32 %v51, %v149
    %v151 = vpop.f32.mrb[0].mxu0
    %v152 = vadd.f32 %v55, %v151
    %153 = vmatprep.mubr.f32.mxu0 0.0
    %154 = vmatmul.mubr.f32.gmra.mrb[0].mxu0 %v66
    %v155 = vpop.f32.mrb[0].mxu0
    %v156 = vadd.f32 %v51, %v155
    %v157 = vpop.f32.mrb[0].mxu0
    %v158 = vadd.f32 %v55, %v157
    %159 = vmatprep.mubr.f32.mxu0 0.0
    %160 = vmatmul.mubr.f32.gmra.mrb[0].mxu0 %v69
    %v161 = vpop.f32.mrb[0].mxu0
    %v162 = vadd.f32 %v51, %v161
    %v163 = vpop.f32.mrb[0].mxu0
    %v164 = vadd.f32 %v55, %v163
    %165 = vmatprep.mubr.f32.mxu0 0.0
    %166 = vmatmul.mubr.f32.gmra.mrb[0].mxu0 %v72
    %v167 = vpop.f32.mrb[0].mxu0
    %v168 = vadd.f32 %v51, %v167
    %v169 = vpop.f32.mrb[0].mxu0
    %v170 = vadd.f32 %v55, %v169
    %171 = vmatprep.mubr.f32.mxu0 0.0
    %172 = vmatmul.mubr.f32.gmra.mrb[0].mxu0 %v75
    %v173 = vpop.f32.mrb[0].mxu0
    %v174 = vadd.f32 %v51, %v173
    %v175 = vpop.f32.mrb[0].mxu0
    %v176 = vadd.f32 %v55, %v175
    %177 = vdwg.mxu0
    %v178 = vmul.f32 %v144, 0.5
    %v179 = vmul.f32 %v146, 0.5
    %v180 = vmul.f32 %v150, 0.5
    %v181 = vmul.f32 %v152, 0.5
    %v182 = vmul.f32 %v156, 0.5
    %v183 = vmul.f32 %v158, 0.5
    %v184 = vmul.f32 %v162, 0.5
    %v185 = vmul.f32 %v164, 0.5
    %v186 = vmul.f32 %v168, 0.5
    %v187 = vmul.f32 %v170, 0.5
    %v188 = vmul.f32 %v174, 0.5
    %v189 = vmul.f32 %v176, 0.5
    %v190 = vld [vmem:[%s4] sm:$0xff]
    %v191 = vld [vmem:[%s4 + $0x8] sm:$0xff]
    %192 = vst [vmem:[%s5] sm:$0xff] %v190
    %193 = vst [vmem:[%s5 + $0x8] sm:$0xff] %v191
    %194 = vst [vmem:[%s6] sm:$0xff] 0.0
    %195 = vst [vmem:[%s6 + $0x8] sm:$0xff] 0.0
    %v196 = vld [vmem:[#allocation2] sm:$0xff]
    %v197 = vld [vmem:[#allocation2 + $0x8] sm:$0xff]
    %v198 = vld [vmem:[#allocation2 + $0x10] sm:$0xff]
    %v199 = vld [vmem:[#allocation2 + $0x18] sm:$0xff]
    %v200 = vld [vmem:[#allocation2 + $0x20] sm:$0xff]
    %v201 = vld [vmem:[#allocation2 + $0x28] sm:$0xff]
    %v202 = vld [vmem:[#allocation2 + $0x30] sm:$0xff]
    %v203 = vld [vmem:[#allocation2 + $0x38] sm:$0xff]
    %v204 = vld [vmem:[#allocation2 + $0x40] sm:$0xff]
    %v205 = vld [vmem:[#allocation2 + $0x48] sm:$0xff]
    %v206 = vld [vmem:[#allocation2 + $0x50] sm:$0xff]
    %v207 = vld [vmem:[#allocation2 + $0x58] sm:$0xff]
    %v208 = vld [vmem:[#allocation2 + $0x60] sm:$0xff]
    %v209 = vld [vmem:[#allocation2 + $0x68] sm:$0xff]
    %v210 = vld [vmem:[#allocation2 + $0x70] sm:$0xff]
    %v211 = vld [vmem:[#allocation2 + $0x78] sm:$0xff]
    %v212 = vld [vmem:[#allocation2 + $0x80] sm:$0xff]
    %v213 = vld [vmem:[#allocation2 + $0x88] sm:$0xff]
    %v214 = vld [vmem:[#allocation2 + $0x90] sm:$0xff]
    %v215 = vld [vmem:[#allocation2 + $0x98] sm:$0xff]
    %v216 = vld [vmem:[#allocation2 + $0xa0] sm:$0xff]
    %v217 = vld [vmem:[#allocation2 + $0xa8] sm:$0xff]
    %v218 = vld [vmem:[#allocation2 + $0xb0] sm:$0xff]
    %v219 = vld [vmem:[#allocation2 + $0xb8] sm:$0xff]
    %v220 = vld [vmem:[#allocation2 + $0xc0] sm:$0xff]
    %v221 = vld [vmem:[#allocation2 + $0xc8] sm:$0xff]
    %v222 = vld [vmem:[#allocation2 + $0xd0] sm:$0xff]
    %v223 = vld [vmem:[#allocation2 + $0xd8] sm:$0xff]
    %v224 = vld [vmem:[#allocation2 + $0xe0] sm:$0xff]
    %v225 = vld [vmem:[#allocation2 + $0xe8] sm:$0xff]
    %v226 = vld [vmem:[#allocation2 + $0xf0] sm:$0xff]
    %v227 = vld [vmem:[#allocation2 + $0xf8] sm:$0xff]
    %v228 = vld [vmem:[#allocation2 + $0x100] sm:$0xff]
    %v229 = vld [vmem:[#allocation2 + $0x108] sm:$0xff]
    %v230 = vld [vmem:[#allocation2 + $0x110] sm:$0xff]
    %v231 = vld [vmem:[#allocation2 + $0x118] sm:$0xff]
    %v232 = vld [vmem:[#allocation2 + $0x120] sm:$0xff]
    %v233 = vld [vmem:[#allocation2 + $0x128] sm:$0xff]
    %v234 = vld [vmem:[#allocation2 + $0x130] sm:$0xff]
    %v235 = vld [vmem:[#allocation2 + $0x138] sm:$0xff]
    %v236 = vld [vmem:[#allocation2 + $0x140] sm:$0xff]
    %v237 = vld [vmem:[#allocation2 + $0x148] sm:$0xff]
    %v238 = vld [vmem:[#allocation2 + $0x150] sm:$0xff]
    %v239 = vld [vmem:[#allocation2 + $0x158] sm:$0xff]
    %v240 = vld [vmem:[#allocation2 + $0x160] sm:$0xff]
    %v241 = vld [vmem:[#allocation2 + $0x168] sm:$0xff]
    %v242 = vld [vmem:[#allocation2 + $0x170] sm:$0xff]
    %v243 = vld [vmem:[#allocation2 + $0x178] sm:$0xff]
    %v244 = vld [vmem:[#allocation2 + $0x180] sm:$0xff]
    %v245 = vld [vmem:[#allocation2 + $0x188] sm:$0xff]
    %v246 = vld [vmem:[#allocation2 + $0x190] sm:$0xff]
    %v247 = vld [vmem:[#allocation2 + $0x198] sm:$0xff]
    %v248 = vld [vmem:[#allocation2 + $0x1a0] sm:$0xff]
    %v249 = vld [vmem:[#allocation2 + $0x1a8] sm:$0xff]
    %v250 = vld [vmem:[#allocation2 + $0x1b0] sm:$0xff]
    %v251 = vld [vmem:[#allocation2 + $0x1b8] sm:$0xff]
    %v252 = vld [vmem:[#allocation2 + $0x1c0] sm:$0xff]
    %v253 = vld [vmem:[#allocation2 + $0x1c8] sm:$0xff]
    %v254 = vld [vmem:[#allocation2 + $0x1d0] sm:$0xff]
    %v255 = vld [vmem:[#allocation2 + $0x1d8] sm:$0xff]
    %v256 = vld [vmem:[#allocation2 + $0x1e0] sm:$0xff]
    %v257 = vld [vmem:[#allocation2 + $0x1e8] sm:$0xff]
    %v258 = vld [vmem:[#allocation2 + $0x1f0] sm:$0xff]
    %v259 = vld [vmem:[#allocation2 + $0x1f8] sm:$0xff]
    %260 = vmatprep.subr.mxu0 %v197
    %261 = vmatpush1.msra.mxu0 %v196
    %262 = vmatprep.subr.mxu0 %v199
    %263 = vmatpush1.msra.mxu0 %v198
    %264 = vmatprep.subr.mxu0 %v201
    %265 = vmatpush1.msra.mxu0 %v200
    %266 = vmatprep.subr.mxu0 %v203
    %267 = vmatpush1.msra.mxu0 %v202
    %268 = vmatprep.subr.mxu0 %v205
    %269 = vmatpush1.msra.mxu0 %v204
    %270 = vmatprep.subr.mxu0 %v207
    %271 = vmatpush1.msra.mxu0 %v206
    %272 = vmatprep.subr.mxu0 %v209
    %273 = vmatpush1.msra.mxu0 %v208
    %274 = vmatprep.subr.mxu0 %v211
    %275 = vmatpush1.msra.mxu0 %v210
    %276 = vmatprep.subr.mxu0 %v213
    %277 = vmatpush1.msra.mxu0 %v212
    %278 = vmatprep.subr.mxu0 %v215
    %279 = vmatpush1.msra.mxu0 %v214
    %280 = vmatprep.subr.mxu0 %v217
    %281 = vmatpush1.msra.mxu0 %v216
    %282 = vmatprep.subr.mxu0 %v219
    %283 = vmatpush1.msra.mxu0 %v218
    %284 = vmatprep.subr.mxu0 %v221
    %285 = vmatpush1.msra.mxu0 %v220
    %286 = vmatprep.subr.mxu0 %v223
    %287 = vmatpush1.msra.mxu0 %v222
    %288 = vmatprep.subr.mxu0 %v225
    %289 = vmatpush1.msra.mxu0 %v224
    %290 = vmatprep.subr.mxu0 %v227
    %291 = vmatpush1.msra.mxu0 %v226
    %292 = vmatprep.subr.mxu0 %v229
    %293 = vmatpush1.msra.mxu0 %v228
    %294 = vmatprep.subr.mxu0 %v231
    %295 = vmatpush1.msra.mxu0 %v230
    %296 = vmatprep.subr.mxu0 %v233
    %297 = vmatpush1.msra.mxu0 %v232
    %298 = vmatprep.subr.mxu0 %v235
    %299 = vmatpush1.msra.mxu0 %v234
    %300 = vmatprep.subr.mxu0 %v237
    %301 = vmatpush1.msra.mxu0 %v236
    %302 = vmatprep.subr.mxu0 %v239
    %303 = vmatpush1.msra.mxu0 %v238
    %304 = vmatprep.subr.mxu0 %v241
    %305 = vmatpush1.msra.mxu0 %v240
    %306 = vmatprep.subr.mxu0 %v243
    %307 = vmatpush1.msra.mxu0 %v242
    %308 = vmatprep.subr.mxu0 %v245
    %309 = vmatpush1.msra.mxu0 %v244
    %310 = vmatprep.subr.mxu0 %v247
    %311 = vmatpush1.msra.mxu0 %v246
    %312 = vmatprep.subr.mxu0 %v249
    %313 = vmatpush1.msra.mxu0 %v248
    %314 = vmatprep.subr.mxu0 %v251
    %315 = vmatpush1.msra.mxu0 %v250
    %316 = vmatprep.subr.mxu0 %v253
    %317 = vmatpush1.msra.mxu0 %v252
    %318 = vmatprep.subr.mxu0 %v255
    %319 = vmatpush1.msra.mxu0 %v254
    %320 = vmatprep.subr.mxu0 %v257
    %321 = vmatpush1.msra.mxu0 %v256
    %322 = vmatprep.subr.mxu0 %v259
    %323 = vmatpush1.msra.mxu0 %v258
    %324 = vmatprep.mubr.f32.mxu0 0.0
    %325 = vmatmul.mubr.f32.gmra.mrb[0].mxu0 0.0
    %v326 = vpop.f32.mrb[0].mxu0
    %v327 = vadd.f32 0.0, %v326
    %v328 = vpop.f32.mrb[0].mxu0
    %v329 = vadd.f32 0.0, %v328
    %330 = vdwg.mxu0
    %v331 = vmul.f32 %v327, 0.5
    %v332 = vmul.f32 %v329, 0.5
    %v333 = vadd.f32 %v331, %v178
    %v334 = vadd.f32 %v332, %v179
    %v335 = vtanh.pop %v333
    %v336 = vtanh.pop %v334
    %v337 = vmul.f32 %v190, 0.5
    %v338 = vmul.f32 %v191, 0.5
    %v339 = vsub.f32 %v337, 0.5
    %v340 = vsub.f32 %v338, 0.5
    %v341 = vadd.f32 %v339, %v335
    %v342 = vadd.f32 %v340, %v336
    %vm343 = vcmp.gt.f32.partialorder %v341, 0.5
    %vm344 = vcmp.gt.f32.partialorder %v342, 0.5
    %v345 = vsel %vm343, 1, 0
    %v346 = vsel %vm344, 1, 0
    %v347 = vcvt.s32.f32 %v345
    %v348 = vcvt.s32.f32 %v346
    %s349 = scalar_lea.vmem %s5, 16
    %350 = vst [vmem:[%s349] sm:$0xff] %v341
    %351 = vst [vmem:[%s349 + $0x8] sm:$0xff] %v342
    %s352 = scalar_lea.vmem %s6, 16
    %353 = vst [vmem:[%s352] sm:$0xff] %v347
    %354 = vst [vmem:[%s352 + $0x8] sm:$0xff] %v348
    %v355 = vld [vmem:[#allocation2] sm:$0xff]
    %v356 = vld [vmem:[#allocation2 + $0x8] sm:$0xff]
    %v357 = vld [vmem:[#allocation2 + $0x10] sm:$0xff]
    %v358 = vld [vmem:[#allocation2 + $0x18] sm:$0xff]
    %v359 = vld [vmem:[#allocation2 + $0x20] sm:$0xff]
    %v360 = vld [vmem:[#allocation2 + $0x28] sm:$0xff]
    %v361 = vld [vmem:[#allocation2 + $0x30] sm:$0xff]
    %v362 = vld [vmem:[#allocation2 + $0x38] sm:$0xff]
    %v363 = vld [vmem:[#allocation2 + $0x40] sm:$0xff]
    %v364 = vld [vmem:[#allocation2 + $0x48] sm:$0xff]
    %v365 = vld [vmem:[#allocation2 + $0x50] sm:$0xff]
    %v366 = vld [vmem:[#allocation2 + $0x58] sm:$0xff]
    %v367 = vld [vmem:[#allocation2 + $0x60] sm:$0xff]
    %v368 = vld [vmem:[#allocation2 + $0x68] sm:$0xff]
    %v369 = vld [vmem:[#allocation2 + $0x70] sm:$0xff]
    %v370 = vld [vmem:[#allocation2 + $0x78] sm:$0xff]
    %v371 = vld [vmem:[#allocation2 + $0x80] sm:$0xff]
    %v372 = vld [vmem:[#allocation2 + $0x88] sm:$0xff]
    %v373 = vld [vmem:[#allocation2 + $0x90] sm:$0xff]
    %v374 = vld [vmem:[#allocation2 + $0x98] sm:$0xff]
    %v375 = vld [vmem:[#allocation2 + $0xa0] sm:$0xff]
    %v376 = vld [vmem:[#allocation2 + $0xa8] sm:$0xff]
    %v377 = vld [vmem:[#allocation2 + $0xb0] sm:$0xff]
    %v378 = vld [vmem:[#allocation2 + $0xb8] sm:$0xff]
    %v379 = vld [vmem:[#allocation2 + $0xc0] sm:$0xff]
    %v380 = vld [vmem:[#allocation2 + $0xc8] sm:$0xff]
    %v381 = vld [vmem:[#allocation2 + $0xd0] sm:$0xff]
    %v382 = vld [vmem:[#allocation2 + $0xd8] sm:$0xff]
    %v383 = vld [vmem:[#allocation2 + $0xe0] sm:$0xff]
    %v384 = vld [vmem:[#allocation2 + $0xe8] sm:$0xff]
    %v385 = vld [vmem:[#allocation2 + $0xf0] sm:$0xff]
    %v386 = vld [vmem:[#allocation2 + $0xf8] sm:$0xff]
    %v387 = vld [vmem:[#allocation2 + $0x100] sm:$0xff]
    %v388 = vld [vmem:[#allocation2 + $0x108] sm:$0xff]
    %v389 = vld [vmem:[#allocation2 + $0x110] sm:$0xff]
    %v390 = vld [vmem:[#allocation2 + $0x118] sm:$0xff]
    %v391 = vld [vmem:[#allocation2 + $0x120] sm:$0xff]
    %v392 = vld [vmem:[#allocation2 + $0x128] sm:$0xff]
    %v393 = vld [vmem:[#allocation2 + $0x130] sm:$0xff]
    %v394 = vld [vmem:[#allocation2 + $0x138] sm:$0xff]
    %v395 = vld [vmem:[#allocation2 + $0x140] sm:$0xff]
    %v396 = vld [vmem:[#allocation2 + $0x148] sm:$0xff]
    %v397 = vld [vmem:[#allocation2 + $0x150] sm:$0xff]
    %v398 = vld [vmem:[#allocation2 + $0x158] sm:$0xff]
    %v399 = vld [vmem:[#allocation2 + $0x160] sm:$0xff]
    %v400 = vld [vmem:[#allocation2 + $0x168] sm:$0xff]
    %v401 = vld [vmem:[#allocation2 + $0x170] sm:$0xff]
    %v402 = vld [vmem:[#allocation2 + $0x178] sm:$0xff]
    %v403 = vld [vmem:[#allocation2 + $0x180] sm:$0xff]
    %v404 = vld [vmem:[#allocation2 + $0x188] sm:$0xff]
    %v405 = vld [vmem:[#allocation2 + $0x190] sm:$0xff]
    %v406 = vld [vmem:[#allocation2 + $0x198] sm:$0xff]
    %v407 = vld [vmem:[#allocation2 + $0x1a0] sm:$0xff]
    %v408 = vld [vmem:[#allocation2 + $0x1a8] sm:$0xff]
    %v409 = vld [vmem:[#allocation2 + $0x1b0] sm:$0xff]
    %v410 = vld [vmem:[#allocation2 + $0x1b8] sm:$0xff]
    %v411 = vld [vmem:[#allocation2 + $0x1c0] sm:$0xff]
    %v412 = vld [vmem:[#allocation2 + $0x1c8] sm:$0xff]
    %v413 = vld [vmem:[#allocation2 + $0x1d0] sm:$0xff]
    %v414 = vld [vmem:[#allocation2 + $0x1d8] sm:$0xff]
    %v415 = vld [vmem:[#allocation2 + $0x1e0] sm:$0xff]
    %v416 = vld [vmem:[#allocation2 + $0x1e8] sm:$0xff]
    %v417 = vld [vmem:[#allocation2 + $0x1f0] sm:$0xff]
    %v418 = vld [vmem:[#allocation2 + $0x1f8] sm:$0xff]
    %419 = vmatprep.subr.mxu0 %v356
    %420 = vmatpush1.msra.mxu0 %v355
    %421 = vmatprep.subr.mxu0 %v358
    %422 = vmatpush1.msra.mxu0 %v357
    %423 = vmatprep.subr.mxu0 %v360
    %424 = vmatpush1.msra.mxu0 %v359
    %425 = vmatprep.subr.mxu0 %v362
    %426 = vmatpush1.msra.mxu0 %v361
    %427 = vmatprep.subr.mxu0 %v364
    %428 = vmatpush1.msra.mxu0 %v363
    %429 = vmatprep.subr.mxu0 %v366
    %430 = vmatpush1.msra.mxu0 %v365
    %431 = vmatprep.subr.mxu0 %v368
    %432 = vmatpush1.msra.mxu0 %v367
    %433 = vmatprep.subr.mxu0 %v370
    %434 = vmatpush1.msra.mxu0 %v369
    %435 = vmatprep.subr.mxu0 %v372
    %436 = vmatpush1.msra.mxu0 %v371
    %437 = vmatprep.subr.mxu0 %v374
    %438 = vmatpush1.msra.mxu0 %v373
    %439 = vmatprep.subr.mxu0 %v376
    %440 = vmatpush1.msra.mxu0 %v375
    %441 = vmatprep.subr.mxu0 %v378
    %442 = vmatpush1.msra.mxu0 %v377
    %443 = vmatprep.subr.mxu0 %v380
    %444 = vmatpush1.msra.mxu0 %v379
    %445 = vmatprep.subr.mxu0 %v382
    %446 = vmatpush1.msra.mxu0 %v381
    %447 = vmatprep.subr.mxu0 %v384
    %448 = vmatpush1.msra.mxu0 %v383
    %449 = vmatprep.subr.mxu0 %v386
    %450 = vmatpush1.msra.mxu0 %v385
    %451 = vmatprep.subr.mxu0 %v388
    %452 = vmatpush1.msra.mxu0 %v387
    %453 = vmatprep.subr.mxu0 %v390
    %454 = vmatpush1.msra.mxu0 %v389
    %455 = vmatprep.subr.mxu0 %v392
    %456 = vmatpush1.msra.mxu0 %v391
    %457 = vmatprep.subr.mxu0 %v394
    %458 = vmatpush1.msra.mxu0 %v393
    %459 = vmatprep.subr.mxu0 %v396
    %460 = vmatpush1.msra.mxu0 %v395
    %461 = vmatprep.subr.mxu0 %v398
    %462 = vmatpush1.msra.mxu0 %v397
    %463 = vmatprep.subr.mxu0 %v400
    %464 = vmatpush1.msra.mxu0 %v399
    %465 = vmatprep.subr.mxu0 %v402
    %466 = vmatpush1.msra.mxu0 %v401
    %467 = vmatprep.subr.mxu0 %v404
    %468 = vmatpush1.msra.mxu0 %v403
    %469 = vmatprep.subr.mxu0 %v406
    %470 = vmatpush1.msra.mxu0 %v405
    %471 = vmatprep.subr.mxu0 %v408
    %472 = vmatpush1.msra.mxu0 %v407
    %473 = vmatprep.subr.mxu0 %v410
    %474 = vmatpush1.msra.mxu0 %v409
    %475 = vmatprep.subr.mxu0 %v412
    %476 = vmatpush1.msra.mxu0 %v411
    %477 = vmatprep.subr.mxu0 %v414
    %478 = vmatpush1.msra.mxu0 %v413
    %479 = vmatprep.subr.mxu0 %v416
    %480 = vmatpush1.msra.mxu0 %v415
    %481 = vmatprep.subr.mxu0 %v418
    %482 = vmatpush1.msra.mxu0 %v417
    %483 = vmatprep.mubr.f32.mxu0 %v348
    %484 = vmatmul.mubr.f32.gmra.mrb[0].mxu0 %v347
    %v485 = vpop.f32.mrb[0].mxu0
    %v486 = vadd.f32 0.0, %v485
    %v487 = vpop.f32.mrb[0].mxu0
    %v488 = vadd.f32 0.0, %v487
    %489 = vdwg.mxu0
    %v490 = vmul.f32 %v486, 0.5
    %v491 = vmul.f32 %v488, 0.5
    %v492 = vadd.f32 %v490, %v180
    %v493 = vadd.f32 %v491, %v181
    %v494 = vtanh.pop %v492
    %v495 = vtanh.pop %v493
    %v496 = vmul.f32 %v341, 0.5
    %v497 = vmul.f32 %v342, 0.5
    %v498 = vsub.f32 1.0, %v347
    %v499 = vsub.f32 1.0, %v348
    %v500 = vmul.f32 %v498, 0.5
    %v501 = vmul.f32 %v499, 0.5
    %v502 = vsub.f32 %v496, %v500
    %v503 = vsub.f32 %v497, %v501
    %v504 = vadd.f32 %v502, %v494
    %v505 = vadd.f32 %v503, %v495
    %vm506 = vcmp.gt.f32.partialorder %v504, 0.5
    %vm507 = vcmp.gt.f32.partialorder %v505, 0.5
    %v508 = vsel %vm506, 1, 0
    %v509 = vsel %vm507, 1, 0
    %v510 = vcvt.s32.f32 %v508
    %v511 = vcvt.s32.f32 %v509
    %s512 = scalar_lea.vmem %s5, 32
    %513 = vst [vmem:[%s512] sm:$0xff] %v504
    %514 = vst [vmem:[%s512 + $0x8] sm:$0xff] %v505
    %s515 = scalar_lea.vmem %s6, 32
    %516 = vst [vmem:[%s515] sm:$0xff] %v510
    %517 = vst [vmem:[%s515 + $0x8] sm:$0xff] %v511
    %v518 = vld [vmem:[#allocation2] sm:$0xff]
    %v519 = vld [vmem:[#allocation2 + $0x8] sm:$0xff]
    %v520 = vld [vmem:[#allocation2 + $0x10] sm:$0xff]
    %v521 = vld [vmem:[#allocation2 + $0x18] sm:$0xff]
    %v522 = vld [vmem:[#allocation2 + $0x20] sm:$0xff]
    %v523 = vld [vmem:[#allocation2 + $0x28] sm:$0xff]
    %v524 = vld [vmem:[#allocation2 + $0x30] sm:$0xff]
    %v525 = vld [vmem:[#allocation2 + $0x38] sm:$0xff]
    %v526 = vld [vmem:[#allocation2 + $0x40] sm:$0xff]
    %v527 = vld [vmem:[#allocation2 + $0x48] sm:$0xff]
    %v528 = vld [vmem:[#allocation2 + $0x50] sm:$0xff]
    %v529 = vld [vmem:[#allocation2 + $0x58] sm:$0xff]
    %v530 = vld [vmem:[#allocation2 + $0x60] sm:$0xff]
    %v531 = vld [vmem:[#allocation2 + $0x68] sm:$0xff]
    %v532 = vld [vmem:[#allocation2 + $0x70] sm:$0xff]
    %v533 = vld [vmem:[#allocation2 + $0x78] sm:$0xff]
    %v534 = vld [vmem:[#allocation2 + $0x80] sm:$0xff]
    %v535 = vld [vmem:[#allocation2 + $0x88] sm:$0xff]
    %v536 = vld [vmem:[#allocation2 + $0x90] sm:$0xff]
    %v537 = vld [vmem:[#allocation2 + $0x98] sm:$0xff]
    %v538 = vld [vmem:[#allocation2 + $0xa0] sm:$0xff]
    %v539 = vld [vmem:[#allocation2 + $0xa8] sm:$0xff]
    %v540 = vld [vmem:[#allocation2 + $0xb0] sm:$0xff]
    %v541 = vld [vmem:[#allocation2 + $0xb8] sm:$0xff]
    %v542 = vld [vmem:[#allocation2 + $0xc0] sm:$0xff]
    %v543 = vld [vmem:[#allocation2 + $0xc8] sm:$0xff]
    %v544 = vld [vmem:[#allocation2 + $0xd0] sm:$0xff]
    %v545 = vld [vmem:[#allocation2 + $0xd8] sm:$0xff]
    %v546 = vld [vmem:[#allocation2 + $0xe0] sm:$0xff]
    %v547 = vld [vmem:[#allocation2 + $0xe8] sm:$0xff]
    %v548 = vld [vmem:[#allocation2 + $0xf0] sm:$0xff]
    %v549 = vld [vmem:[#allocation2 + $0xf8] sm:$0xff]
    %v550 = vld [vmem:[#allocation2 + $0x100] sm:$0xff]
    %v551 = vld [vmem:[#allocation2 + $0x108] sm:$0xff]
    %v552 = vld [vmem:[#allocation2 + $0x110] sm:$0xff]
    %v553 = vld [vmem:[#allocation2 + $0x118] sm:$0xff]
    %v554 = vld [vmem:[#allocation2 + $0x120] sm:$0xff]
    %v555 = vld [vmem:[#allocation2 + $0x128] sm:$0xff]
    %v556 = vld [vmem:[#allocation2 + $0x130] sm:$0xff]
    %v557 = vld [vmem:[#allocation2 + $0x138] sm:$0xff]
    %v558 = vld [vmem:[#allocation2 + $0x140] sm:$0xff]
    %v559 = vld [vmem:[#allocation2 + $0x148] sm:$0xff]
    %v560 = vld [vmem:[#allocation2 + $0x150] sm:$0xff]
    %v561 = vld [vmem:[#allocation2 + $0x158] sm:$0xff]
    %v562 = vld [vmem:[#allocation2 + $0x160] sm:$0xff]
    %v563 = vld [vmem:[#allocation2 + $0x168] sm:$0xff]
    %v564 = vld [vmem:[#allocation2 + $0x170] sm:$0xff]
    %v565 = vld [vmem:[#allocation2 + $0x178] sm:$0xff]
    %v566 = vld [vmem:[#allocation2 + $0x180] sm:$0xff]
    %v567 = vld [vmem:[#allocation2 + $0x188] sm:$0xff]
    %v568 = vld [vmem:[#allocation2 + $0x190] sm:$0xff]
    %v569 = vld [vmem:[#allocation2 + $0x198] sm:$0xff]
    %v570 = vld [vmem:[#allocation2 + $0x1a0] sm:$0xff]
    %v571 = vld [vmem:[#allocation2 + $0x1a8] sm:$0xff]
    %v572 = vld [vmem:[#allocation2 + $0x1b0] sm:$0xff]
    %v573 = vld [vmem:[#allocation2 + $0x1b8] sm:$0xff]
    %v574 = vld [vmem:[#allocation2 + $0x1c0] sm:$0xff]
    %v575 = vld [vmem:[#allocation2 + $0x1c8] sm:$0xff]
    %v576 = vld [vmem:[#allocation2 + $0x1d0] sm:$0xff]
    %v577 = vld [vmem:[#allocation2 + $0x1d8] sm:$0xff]
    %v578 = vld [vmem:[#allocation2 + $0x1e0] sm:$0xff]
    %v579 = vld [vmem:[#allocation2 + $0x1e8] sm:$0xff]
    %v580 = vld [vmem:[#allocation2 + $0x1f0] sm:$0xff]
    %v581 = vld [vmem:[#allocation2 + $0x1f8] sm:$0xff]
    %582 = vmatprep.subr.mxu0 %v519
    %583 = vmatpush1.msra.mxu0 %v518
    %584 = vmatprep.subr.mxu0 %v521
    %585 = vmatpush1.msra.mxu0 %v520
    %586 = vmatprep.subr.mxu0 %v523
    %587 = vmatpush1.msra.mxu0 %v522
    %588 = vmatprep.subr.mxu0 %v525
    %589 = vmatpush1.msra.mxu0 %v524
    %590 = vmatprep.subr.mxu0 %v527
    %591 = vmatpush1.msra.mxu0 %v526
    %592 = vmatprep.subr.mxu0 %v529
    %593 = vmatpush1.msra.mxu0 %v528
    %594 = vmatprep.subr.mxu0 %v531
    %595 = vmatpush1.msra.mxu0 %v530
    %596 = vmatprep.subr.mxu0 %v533
    %597 = vmatpush1.msra.mxu0 %v532
    %598 = vmatprep.subr.mxu0 %v535
    %599 = vmatpush1.msra.mxu0 %v534
    %600 = vmatprep.subr.mxu0 %v537
    %601 = vmatpush1.msra.mxu0 %v536
    %602 = vmatprep.subr.mxu0 %v539
    %603 = vmatpush1.msra.mxu0 %v538
    %604 = vmatprep.subr.mxu0 %v541
    %605 = vmatpush1.msra.mxu0 %v540
    %606 = vmatprep.subr.mxu0 %v543
    %607 = vmatpush1.msra.mxu0 %v542
    %608 = vmatprep.subr.mxu0 %v545
    %609 = vmatpush1.msra.mxu0 %v544
    %610 = vmatprep.subr.mxu0 %v547
    %611 = vmatpush1.msra.mxu0 %v546
    %612 = vmatprep.subr.mxu0 %v549
    %613 = vmatpush1.msra.mxu0 %v548
    %614 = vmatprep.subr.mxu0 %v551
    %615 = vmatpush1.msra.mxu0 %v550
    %616 = vmatprep.subr.mxu0 %v553
    %617 = vmatpush1.msra.mxu0 %v552
    %618 = vmatprep.subr.mxu0 %v555
    %619 = vmatpush1.msra.mxu0 %v554
    %620 = vmatprep.subr.mxu0 %v557
    %621 = vmatpush1.msra.mxu0 %v556
    %622 = vmatprep.subr.mxu0 %v559
    %623 = vmatpush1.msra.mxu0 %v558
    %624 = vmatprep.subr.mxu0 %v561
    %625 = vmatpush1.msra.mxu0 %v560
    %626 = vmatprep.subr.mxu0 %v563
    %627 = vmatpush1.msra.mxu0 %v562
    %628 = vmatprep.subr.mxu0 %v565
    %629 = vmatpush1.msra.mxu0 %v564
    %630 = vmatprep.subr.mxu0 %v567
    %631 = vmatpush1.msra.mxu0 %v566
    %632 = vmatprep.subr.mxu0 %v569
    %633 = vmatpush1.msra.mxu0 %v568
    %634 = vmatprep.subr.mxu0 %v571
    %635 = vmatpush1.msra.mxu0 %v570
    %636 = vmatprep.subr.mxu0 %v573
    %637 = vmatpush1.msra.mxu0 %v572
    %638 = vmatprep.subr.mxu0 %v575
    %639 = vmatpush1.msra.mxu0 %v574
    %640 = vmatprep.subr.mxu0 %v577
    %641 = vmatpush1.msra.mxu0 %v576
    %642 = vmatprep.subr.mxu0 %v579
    %643 = vmatpush1.msra.mxu0 %v578
    %644 = vmatprep.subr.mxu0 %v581
    %645 = vmatpush1.msra.mxu0 %v580
    %646 = vmatprep.mubr.f32.mxu0 %v511
    %647 = vmatmul.mubr.f32.gmra.mrb[0].mxu0 %v510
    %v648 = vpop.f32.mrb[0].mxu0
    %v649 = vadd.f32 0.0, %v648
    %v650 = vpop.f32.mrb[0].mxu0
    %v651 = vadd.f32 0.0, %v650
    %652 = vdwg.mxu0
    %v653 = vmul.f32 %v649, 0.5
    %v654 = vmul.f32 %v651, 0.5
    %v655 = vadd.f32 %v653, %v182
    %v656 = vadd.f32 %v654, %v183
    %v657 = vtanh.pop %v655
    %v658 = vtanh.pop %v656
    %v659 = vmul.f32 %v504, 0.5
    %v660 = vmul.f32 %v505, 0.5
    %v661 = vsub.f32 1.0, %v510
    %v662 = vsub.f32 1.0, %v511
    %v663 = vmul.f32 %v661, 0.5
    %v664 = vmul.f32 %v662, 0.5
    %v665 = vsub.f32 %v659, %v663
    %v666 = vsub.f32 %v660, %v664
    %v667 = vadd.f32 %v665, %v657
    %v668 = vadd.f32 %v666, %v658
    %vm669 = vcmp.gt.f32.partialorder %v667, 0.5
    %vm670 = vcmp.gt.f32.partialorder %v668, 0.5
    %v671 = vsel %vm669, 1, 0
    %v672 = vsel %vm670, 1, 0
    %v673 = vcvt.s32.f32 %v671
    %v674 = vcvt.s32.f32 %v672
    %s675 = scalar_lea.vmem %s5, 48
    %676 = vst [vmem:[%s675] sm:$0xff] %v667
    %677 = vst [vmem:[%s675 + $0x8] sm:$0xff] %v668
    %s678 = scalar_lea.vmem %s6, 48
    %679 = vst [vmem:[%s678] sm:$0xff] %v673
    %680 = vst [vmem:[%s678 + $0x8] sm:$0xff] %v674
    %v681 = vld [vmem:[#allocation2] sm:$0xff]
    %v682 = vld [vmem:[#allocation2 + $0x8] sm:$0xff]
    %v683 = vld [vmem:[#allocation2 + $0x10] sm:$0xff]
    %v684 = vld [vmem:[#allocation2 + $0x18] sm:$0xff]
    %v685 = vld [vmem:[#allocation2 + $0x20] sm:$0xff]
    %v686 = vld [vmem:[#allocation2 + $0x28] sm:$0xff]
    %v687 = vld [vmem:[#allocation2 + $0x30] sm:$0xff]
    %v688 = vld [vmem:[#allocation2 + $0x38] sm:$0xff]
    %v689 = vld [vmem:[#allocation2 + $0x40] sm:$0xff]
    %v690 = vld [vmem:[#allocation2 + $0x48] sm:$0xff]
    %v691 = vld [vmem:[#allocation2 + $0x50] sm:$0xff]
    %v692 = vld [vmem:[#allocation2 + $0x58] sm:$0xff]
    %v693 = vld [vmem:[#allocation2 + $0x60] sm:$0xff]
    %v694 = vld [vmem:[#allocation2 + $0x68] sm:$0xff]
    %v695 = vld [vmem:[#allocation2 + $0x70] sm:$0xff]
    %v696 = vld [vmem:[#allocation2 + $0x78] sm:$0xff]
    %v697 = vld [vmem:[#allocation2 + $0x80] sm:$0xff]
    %v698 = vld [vmem:[#allocation2 + $0x88] sm:$0xff]
    %v699 = vld [vmem:[#allocation2 + $0x90] sm:$0xff]
    %v700 = vld [vmem:[#allocation2 + $0x98] sm:$0xff]
    %v701 = vld [vmem:[#allocation2 + $0xa0] sm:$0xff]
    %v702 = vld [vmem:[#allocation2 + $0xa8] sm:$0xff]
    %v703 = vld [vmem:[#allocation2 + $0xb0] sm:$0xff]
    %v704 = vld [vmem:[#allocation2 + $0xb8] sm:$0xff]
    %v705 = vld [vmem:[#allocation2 + $0xc0] sm:$0xff]
    %v706 = vld [vmem:[#allocation2 + $0xc8] sm:$0xff]
    %v707 = vld [vmem:[#allocation2 + $0xd0] sm:$0xff]
    %v708 = vld [vmem:[#allocation2 + $0xd8] sm:$0xff]
    %v709 = vld [vmem:[#allocation2 + $0xe0] sm:$0xff]
    %v710 = vld [vmem:[#allocation2 + $0xe8] sm:$0xff]
    %v711 = vld [vmem:[#allocation2 + $0xf0] sm:$0xff]
    %v712 = vld [vmem:[#allocation2 + $0xf8] sm:$0xff]
    %v713 = vld [vmem:[#allocation2 + $0x100] sm:$0xff]
    %v714 = vld [vmem:[#allocation2 + $0x108] sm:$0xff]
    %v715 = vld [vmem:[#allocation2 + $0x110] sm:$0xff]
    %v716 = vld [vmem:[#allocation2 + $0x118] sm:$0xff]
    %v717 = vld [vmem:[#allocation2 + $0x120] sm:$0xff]
    %v718 = vld [vmem:[#allocation2 + $0x128] sm:$0xff]
    %v719 = vld [vmem:[#allocation2 + $0x130] sm:$0xff]
    %v720 = vld [vmem:[#allocation2 + $0x138] sm:$0xff]
    %v721 = vld [vmem:[#allocation2 + $0x140] sm:$0xff]
    %v722 = vld [vmem:[#allocation2 + $0x148] sm:$0xff]
    %v723 = vld [vmem:[#allocation2 + $0x150] sm:$0xff]
    %v724 = vld [vmem:[#allocation2 + $0x158] sm:$0xff]
    %v725 = vld [vmem:[#allocation2 + $0x160] sm:$0xff]
    %v726 = vld [vmem:[#allocation2 + $0x168] sm:$0xff]
    %v727 = vld [vmem:[#allocation2 + $0x170] sm:$0xff]
    %v728 = vld [vmem:[#allocation2 + $0x178] sm:$0xff]
    %v729 = vld [vmem:[#allocation2 + $0x180] sm:$0xff]
    %v730 = vld [vmem:[#allocation2 + $0x188] sm:$0xff]
    %v731 = vld [vmem:[#allocation2 + $0x190] sm:$0xff]
    %v732 = vld [vmem:[#allocation2 + $0x198] sm:$0xff]
    %v733 = vld [vmem:[#allocation2 + $0x1a0] sm:$0xff]
    %v734 = vld [vmem:[#allocation2 + $0x1a8] sm:$0xff]
    %v735 = vld [vmem:[#allocation2 + $0x1b0] sm:$0xff]
    %v736 = vld [vmem:[#allocation2 + $0x1b8] sm:$0xff]
    %v737 = vld [vmem:[#allocation2 + $0x1c0] sm:$0xff]
    %v738 = vld [vmem:[#allocation2 + $0x1c8] sm:$0xff]
    %v739 = vld [vmem:[#allocation2 + $0x1d0] sm:$0xff]
    %v740 = vld [vmem:[#allocation2 + $0x1d8] sm:$0xff]
    %v741 = vld [vmem:[#allocation2 + $0x1e0] sm:$0xff]
    %v742 = vld [vmem:[#allocation2 + $0x1e8] sm:$0xff]
    %v743 = vld [vmem:[#allocation2 + $0x1f0] sm:$0xff]
    %v744 = vld [vmem:[#allocation2 + $0x1f8] sm:$0xff]
    %745 = vmatprep.subr.mxu0 %v682
    %746 = vmatpush1.msra.mxu0 %v681
    %747 = vmatprep.subr.mxu0 %v684
    %748 = vmatpush1.msra.mxu0 %v683
    %749 = vmatprep.subr.mxu0 %v686
    %750 = vmatpush1.msra.mxu0 %v685
    %751 = vmatprep.subr.mxu0 %v688
    %752 = vmatpush1.msra.mxu0 %v687
    %753 = vmatprep.subr.mxu0 %v690
    %754 = vmatpush1.msra.mxu0 %v689
    %755 = vmatprep.subr.mxu0 %v692
    %756 = vmatpush1.msra.mxu0 %v691
    %757 = vmatprep.subr.mxu0 %v694
    %758 = vmatpush1.msra.mxu0 %v693
    %759 = vmatprep.subr.mxu0 %v696
    %760 = vmatpush1.msra.mxu0 %v695
    %761 = vmatprep.subr.mxu0 %v698
    %762 = vmatpush1.msra.mxu0 %v697
    %763 = vmatprep.subr.mxu0 %v700
    %764 = vmatpush1.msra.mxu0 %v699
    %765 = vmatprep.subr.mxu0 %v702
    %766 = vmatpush1.msra.mxu0 %v701
    %767 = vmatprep.subr.mxu0 %v704
    %768 = vmatpush1.msra.mxu0 %v703
    %769 = vmatprep.subr.mxu0 %v706
    %770 = vmatpush1.msra.mxu0 %v705
    %771 = vmatprep.subr.mxu0 %v708
    %772 = vmatpush1.msra.mxu0 %v707
    %773 = vmatprep.subr.mxu0 %v710
    %774 = vmatpush1.msra.mxu0 %v709
    %775 = vmatprep.subr.mxu0 %v712
    %776 = vmatpush1.msra.mxu0 %v711
    %777 = vmatprep.subr.mxu0 %v714
    %778 = vmatpush1.msra.mxu0 %v713
    %779 = vmatprep.subr.mxu0 %v716
    %780 = vmatpush1.msra.mxu0 %v715
    %781 = vmatprep.subr.mxu0 %v718
    %782 = vmatpush1.msra.mxu0 %v717
    %783 = vmatprep.subr.mxu0 %v720
    %784 = vmatpush1.msra.mxu0 %v719
    %785 = vmatprep.subr.mxu0 %v722
    %786 = vmatpush1.msra.mxu0 %v721
    %787 = vmatprep.subr.mxu0 %v724
    %788 = vmatpush1.msra.mxu0 %v723
    %789 = vmatprep.subr.mxu0 %v726
    %790 = vmatpush1.msra.mxu0 %v725
    %791 = vmatprep.subr.mxu0 %v728
    %792 = vmatpush1.msra.mxu0 %v727
    %793 = vmatprep.subr.mxu0 %v730
    %794 = vmatpush1.msra.mxu0 %v729
    %795 = vmatprep.subr.mxu0 %v732
    %796 = vmatpush1.msra.mxu0 %v731
    %797 = vmatprep.subr.mxu0 %v734
    %798 = vmatpush1.msra.mxu0 %v733
    %799 = vmatprep.subr.mxu0 %v736
    %800 = vmatpush1.msra.mxu0 %v735
    %801 = vmatprep.subr.mxu0 %v738
    %802 = vmatpush1.msra.mxu0 %v737
    %803 = vmatprep.subr.mxu0 %v740
    %804 = vmatpush1.msra.mxu0 %v739
    %805 = vmatprep.subr.mxu0 %v742
    %806 = vmatpush1.msra.mxu0 %v741
    %807 = vmatprep.subr.mxu0 %v744
    %808 = vmatpush1.msra.mxu0 %v743
    %809 = vmatprep.mubr.f32.mxu0 %v674
    %810 = vmatmul.mubr.f32.gmra.mrb[0].mxu0 %v673
    %v811 = vpop.f32.mrb[0].mxu0
    %v812 = vadd.f32 0.0, %v811
    %v813 = vpop.f32.mrb[0].mxu0
    %v814 = vadd.f32 0.0, %v813
    %815 = vdwg.mxu0
    %v816 = vmul.f32 %v812, 0.5
    %v817 = vmul.f32 %v814, 0.5
    %v818 = vadd.f32 %v816, %v184
    %v819 = vadd.f32 %v817, %v185
    %v820 = vtanh.pop %v818
    %v821 = vtanh.pop %v819
    %v822 = vmul.f32 %v667, 0.5
    %v823 = vmul.f32 %v668, 0.5
    %v824 = vsub.f32 1.0, %v673
    %v825 = vsub.f32 1.0, %v674
    %v826 = vmul.f32 %v824, 0.5
    %v827 = vmul.f32 %v825, 0.5
    %v828 = vsub.f32 %v822, %v826
    %v829 = vsub.f32 %v823, %v827
    %v830 = vadd.f32 %v828, %v820
    %v831 = vadd.f32 %v829, %v821
    %vm832 = vcmp.gt.f32.partialorder %v830, 0.5
    %vm833 = vcmp.gt.f32.partialorder %v831, 0.5
    %v834 = vsel %vm832, 1, 0
    %v835 = vsel %vm833, 1, 0
    %v836 = vcvt.s32.f32 %v834
    %v837 = vcvt.s32.f32 %v835
    %s838 = scalar_lea.vmem %s5, 64
    %839 = vst [vmem:[%s838] sm:$0xff] %v830
    %840 = vst [vmem:[%s838 + $0x8] sm:$0xff] %v831
    %s841 = scalar_lea.vmem %s6, 64
    %842 = vst [vmem:[%s841] sm:$0xff] %v836
    %843 = vst [vmem:[%s841 + $0x8] sm:$0xff] %v837
    %v844 = vld [vmem:[#allocation2] sm:$0xff]
    %v845 = vld [vmem:[#allocation2 + $0x8] sm:$0xff]
    %v846 = vld [vmem:[#allocation2 + $0x10] sm:$0xff]
    %v847 = vld [vmem:[#allocation2 + $0x18] sm:$0xff]
    %v848 = vld [vmem:[#allocation2 + $0x20] sm:$0xff]
    %v849 = vld [vmem:[#allocation2 + $0x28] sm:$0xff]
    %v850 = vld [vmem:[#allocation2 + $0x30] sm:$0xff]
    %v851 = vld [vmem:[#allocation2 + $0x38] sm:$0xff]
    %v852 = vld [vmem:[#allocation2 + $0x40] sm:$0xff]
    %v853 = vld [vmem:[#allocation2 + $0x48] sm:$0xff]
    %v854 = vld [vmem:[#allocation2 + $0x50] sm:$0xff]
    %v855 = vld [vmem:[#allocation2 + $0x58] sm:$0xff]
    %v856 = vld [vmem:[#allocation2 + $0x60] sm:$0xff]
    %v857 = vld [vmem:[#allocation2 + $0x68] sm:$0xff]
    %v858 = vld [vmem:[#allocation2 + $0x70] sm:$0xff]
    %v859 = vld [vmem:[#allocation2 + $0x78] sm:$0xff]
    %v860 = vld [vmem:[#allocation2 + $0x80] sm:$0xff]
    %v861 = vld [vmem:[#allocation2 + $0x88] sm:$0xff]
    %v862 = vld [vmem:[#allocation2 + $0x90] sm:$0xff]
    %v863 = vld [vmem:[#allocation2 + $0x98] sm:$0xff]
    %v864 = vld [vmem:[#allocation2 + $0xa0] sm:$0xff]
    %v865 = vld [vmem:[#allocation2 + $0xa8] sm:$0xff]
    %v866 = vld [vmem:[#allocation2 + $0xb0] sm:$0xff]
    %v867 = vld [vmem:[#allocation2 + $0xb8] sm:$0xff]
    %v868 = vld [vmem:[#allocation2 + $0xc0] sm:$0xff]
    %v869 = vld [vmem:[#allocation2 + $0xc8] sm:$0xff]
    %v870 = vld [vmem:[#allocation2 + $0xd0] sm:$0xff]
    %v871 = vld [vmem:[#allocation2 + $0xd8] sm:$0xff]
    %v872 = vld [vmem:[#allocation2 + $0xe0] sm:$0xff]
    %v873 = vld [vmem:[#allocation2 + $0xe8] sm:$0xff]
    %v874 = vld [vmem:[#allocation2 + $0xf0] sm:$0xff]
    %v875 = vld [vmem:[#allocation2 + $0xf8] sm:$0xff]
    %v876 = vld [vmem:[#allocation2 + $0x100] sm:$0xff]
    %v877 = vld [vmem:[#allocation2 + $0x108] sm:$0xff]
    %v878 = vld [vmem:[#allocation2 + $0x110] sm:$0xff]
    %v879 = vld [vmem:[#allocation2 + $0x118] sm:$0xff]
    %v880 = vld [vmem:[#allocation2 + $0x120] sm:$0xff]
    %v881 = vld [vmem:[#allocation2 + $0x128] sm:$0xff]
    %v882 = vld [vmem:[#allocation2 + $0x130] sm:$0xff]
    %v883 = vld [vmem:[#allocation2 + $0x138] sm:$0xff]
    %v884 = vld [vmem:[#allocation2 + $0x140] sm:$0xff]
    %v885 = vld [vmem:[#allocation2 + $0x148] sm:$0xff]
    %v886 = vld [vmem:[#allocation2 + $0x150] sm:$0xff]
    %v887 = vld [vmem:[#allocation2 + $0x158] sm:$0xff]
    %v888 = vld [vmem:[#allocation2 + $0x160] sm:$0xff]
    %v889 = vld [vmem:[#allocation2 + $0x168] sm:$0xff]
    %v890 = vld [vmem:[#allocation2 + $0x170] sm:$0xff]
    %v891 = vld [vmem:[#allocation2 + $0x178] sm:$0xff]
    %v892 = vld [vmem:[#allocation2 + $0x180] sm:$0xff]
    %v893 = vld [vmem:[#allocation2 + $0x188] sm:$0xff]
    %v894 = vld [vmem:[#allocation2 + $0x190] sm:$0xff]
    %v895 = vld [vmem:[#allocation2 + $0x198] sm:$0xff]
    %v896 = vld [vmem:[#allocation2 + $0x1a0] sm:$0xff]
    %v897 = vld [vmem:[#allocation2 + $0x1a8] sm:$0xff]
    %v898 = vld [vmem:[#allocation2 + $0x1b0] sm:$0xff]
    %v899 = vld [vmem:[#allocation2 + $0x1b8] sm:$0xff]
    %v900 = vld [vmem:[#allocation2 + $0x1c0] sm:$0xff]
    %v901 = vld [vmem:[#allocation2 + $0x1c8] sm:$0xff]
    %v902 = vld [vmem:[#allocation2 + $0x1d0] sm:$0xff]
    %v903 = vld [vmem:[#allocation2 + $0x1d8] sm:$0xff]
    %v904 = vld [vmem:[#allocation2 + $0x1e0] sm:$0xff]
    %v905 = vld [vmem:[#allocation2 + $0x1e8] sm:$0xff]
    %v906 = vld [vmem:[#allocation2 + $0x1f0] sm:$0xff]
    %v907 = vld [vmem:[#allocation2 + $0x1f8] sm:$0xff]
    %908 = vmatprep.subr.mxu0 %v845
    %909 = vmatpush1.msra.mxu0 %v844
    %910 = vmatprep.subr.mxu0 %v847
    %911 = vmatpush1.msra.mxu0 %v846
    %912 = vmatprep.subr.mxu0 %v849
    %913 = vmatpush1.msra.mxu0 %v848
    %914 = vmatprep.subr.mxu0 %v851
    %915 = vmatpush1.msra.mxu0 %v850
    %916 = vmatprep.subr.mxu0 %v853
    %917 = vmatpush1.msra.mxu0 %v852
    %918 = vmatprep.subr.mxu0 %v855
    %919 = vmatpush1.msra.mxu0 %v854
    %920 = vmatprep.subr.mxu0 %v857
    %921 = vmatpush1.msra.mxu0 %v856
    %922 = vmatprep.subr.mxu0 %v859
    %923 = vmatpush1.msra.mxu0 %v858
    %924 = vmatprep.subr.mxu0 %v861
    %925 = vmatpush1.msra.mxu0 %v860
    %926 = vmatprep.subr.mxu0 %v863
    %927 = vmatpush1.msra.mxu0 %v862
    %928 = vmatprep.subr.mxu0 %v865
    %929 = vmatpush1.msra.mxu0 %v864
    %930 = vmatprep.subr.mxu0 %v867
    %931 = vmatpush1.msra.mxu0 %v866
    %932 = vmatprep.subr.mxu0 %v869
    %933 = vmatpush1.msra.mxu0 %v868
    %934 = vmatprep.subr.mxu0 %v871
    %935 = vmatpush1.msra.mxu0 %v870
    %936 = vmatprep.subr.mxu0 %v873
    %937 = vmatpush1.msra.mxu0 %v872
    %938 = vmatprep.subr.mxu0 %v875
    %939 = vmatpush1.msra.mxu0 %v874
    %940 = vmatprep.subr.mxu0 %v877
    %941 = vmatpush1.msra.mxu0 %v876
    %942 = vmatprep.subr.mxu0 %v879
    %943 = vmatpush1.msra.mxu0 %v878
    %944 = vmatprep.subr.mxu0 %v881
    %945 = vmatpush1.msra.mxu0 %v880
    %946 = vmatprep.subr.mxu0 %v883
    %947 = vmatpush1.msra.mxu0 %v882
    %948 = vmatprep.subr.mxu0 %v885
    %949 = vmatpush1.msra.mxu0 %v884
    %950 = vmatprep.subr.mxu0 %v887
    %951 = vmatpush1.msra.mxu0 %v886
    %952 = vmatprep.subr.mxu0 %v889
    %953 = vmatpush1.msra.mxu0 %v888
    %954 = vmatprep.subr.mxu0 %v891
    %955 = vmatpush1.msra.mxu0 %v890
    %956 = vmatprep.subr.mxu0 %v893
    %957 = vmatpush1.msra.mxu0 %v892
    %958 = vmatprep.subr.mxu0 %v895
    %959 = vmatpush1.msra.mxu0 %v894
    %960 = vmatprep.subr.mxu0 %v897
    %961 = vmatpush1.msra.mxu0 %v896
    %962 = vmatprep.subr.mxu0 %v899
    %963 = vmatpush1.msra.mxu0 %v898
    %964 = vmatprep.subr.mxu0 %v901
    %965 = vmatpush1.msra.mxu0 %v900
    %966 = vmatprep.subr.mxu0 %v903
    %967 = vmatpush1.msra.mxu0 %v902
    %968 = vmatprep.subr.mxu0 %v905
    %969 = vmatpush1.msra.mxu0 %v904
    %970 = vmatprep.subr.mxu0 %v907
    %971 = vmatpush1.msra.mxu0 %v906
    %972 = vmatprep.mubr.f32.mxu0 %v837
    %973 = vmatmul.mubr.f32.gmra.mrb[0].mxu0 %v836
    %v974 = vpop.f32.mrb[0].mxu0
    %v975 = vadd.f32 0.0, %v974
    %v976 = vpop.f32.mrb[0].mxu0
    %v977 = vadd.f32 0.0, %v976
    %978 = vdwg.mxu0
    %v979 = vmul.f32 %v975, 0.5
    %v980 = vmul.f32 %v977, 0.5
    %v981 = vadd.f32 %v979, %v186
    %v982 = vadd.f32 %v980, %v187
    %v983 = vtanh.pop %v981
    %v984 = vtanh.pop %v982
    %v985 = vmul.f32 %v830, 0.5
    %v986 = vmul.f32 %v831, 0.5
    %v987 = vsub.f32 1.0, %v836
    %v988 = vsub.f32 1.0, %v837
    %v989 = vmul.f32 %v987, 0.5
    %v990 = vmul.f32 %v988, 0.5
    %v991 = vsub.f32 %v985, %v989
    %v992 = vsub.f32 %v986, %v990
    %v993 = vadd.f32 %v991, %v983
    %v994 = vadd.f32 %v992, %v984
    %vm995 = vcmp.gt.f32.partialorder %v993, 0.5
    %vm996 = vcmp.gt.f32.partialorder %v994, 0.5
    %v997 = vsel %vm995, 1, 0
    %v998 = vsel %vm996, 1, 0
    %v999 = vcvt.s32.f32 %v997
    %v1000 = vcvt.s32.f32 %v998
    %s1001 = scalar_lea.vmem %s5, 80
    %1002 = vst [vmem:[%s1001] sm:$0xff] %v993
    %1003 = vst [vmem:[%s1001 + $0x8] sm:$0xff] %v994
    %s1004 = scalar_lea.vmem %s6, 80
    %1005 = vst [vmem:[%s1004] sm:$0xff] %v999
    %1006 = vst [vmem:[%s1004 + $0x8] sm:$0xff] %v1000
    %v1007 = vld [vmem:[#allocation2] sm:$0xff]
    %v1008 = vld [vmem:[#allocation2 + $0x8] sm:$0xff]
    %v1009 = vld [vmem:[#allocation2 + $0x10] sm:$0xff]
    %v1010 = vld [vmem:[#allocation2 + $0x18] sm:$0xff]
    %v1011 = vld [vmem:[#allocation2 + $0x20] sm:$0xff]
    %v1012 = vld [vmem:[#allocation2 + $0x28] sm:$0xff]
    %v1013 = vld [vmem:[#allocation2 + $0x30] sm:$0xff]
    %v1014 = vld [vmem:[#allocation2 + $0x38] sm:$0xff]
    %v1015 = vld [vmem:[#allocation2 + $0x40] sm:$0xff]
    %v1016 = vld [vmem:[#allocation2 + $0x48] sm:$0xff]
    %v1017 = vld [vmem:[#allocation2 + $0x50] sm:$0xff]
    %v1018 = vld [vmem:[#allocation2 + $0x58] sm:$0xff]
    %v1019 = vld [vmem:[#allocation2 + $0x60] sm:$0xff]
    %v1020 = vld [vmem:[#allocation2 + $0x68] sm:$0xff]
    %v1021 = vld [vmem:[#allocation2 + $0x70] sm:$0xff]
    %v1022 = vld [vmem:[#allocation2 + $0x78] sm:$0xff]
    %v1023 = vld [vmem:[#allocation2 + $0x80] sm:$0xff]
    %v1024 = vld [vmem:[#allocation2 + $0x88] sm:$0xff]
    %v1025 = vld [vmem:[#allocation2 + $0x90] sm:$0xff]
    %v1026 = vld [vmem:[#allocation2 + $0x98] sm:$0xff]
    %v1027 = vld [vmem:[#allocation2 + $0xa0] sm:$0xff]
    %v1028 = vld [vmem:[#allocation2 + $0xa8] sm:$0xff]
    %v1029 = vld [vmem:[#allocation2 + $0xb0] sm:$0xff]
    %v1030 = vld [vmem:[#allocation2 + $0xb8] sm:$0xff]
    %v1031 = vld [vmem:[#allocation2 + $0xc0] sm:$0xff]
    %v1032 = vld [vmem:[#allocation2 + $0xc8] sm:$0xff]
    %v1033 = vld [vmem:[#allocation2 + $0xd0] sm:$0xff]
    %v1034 = vld [vmem:[#allocation2 + $0xd8] sm:$0xff]
    %v1035 = vld [vmem:[#allocation2 + $0xe0] sm:$0xff]
    %v1036 = vld [vmem:[#allocation2 + $0xe8] sm:$0xff]
    %v1037 = vld [vmem:[#allocation2 + $0xf0] sm:$0xff]
    %v1038 = vld [vmem:[#allocation2 + $0xf8] sm:$0xff]
    %v1039 = vld [vmem:[#allocation2 + $0x100] sm:$0xff]
    %v1040 = vld [vmem:[#allocation2 + $0x108] sm:$0xff]
    %v1041 = vld [vmem:[#allocation2 + $0x110] sm:$0xff]
    %v1042 = vld [vmem:[#allocation2 + $0x118] sm:$0xff]
    %v1043 = vld [vmem:[#allocation2 + $0x120] sm:$0xff]
    %v1044 = vld [vmem:[#allocation2 + $0x128] sm:$0xff]
    %v1045 = vld [vmem:[#allocation2 + $0x130] sm:$0xff]
    %v1046 = vld [vmem:[#allocation2 + $0x138] sm:$0xff]
    %v1047 = vld [vmem:[#allocation2 + $0x140] sm:$0xff]
    %v1048 = vld [vmem:[#allocation2 + $0x148] sm:$0xff]
    %v1049 = vld [vmem:[#allocation2 + $0x150] sm:$0xff]
    %v1050 = vld [vmem:[#allocation2 + $0x158] sm:$0xff]
    %v1051 = vld [vmem:[#allocation2 + $0x160] sm:$0xff]
    %v1052 = vld [vmem:[#allocation2 + $0x168] sm:$0xff]
    %v1053 = vld [vmem:[#allocation2 + $0x170] sm:$0xff]
    %v1054 = vld [vmem:[#allocation2 + $0x178] sm:$0xff]
    %v1055 = vld [vmem:[#allocation2 + $0x180] sm:$0xff]
    %v1056 = vld [vmem:[#allocation2 + $0x188] sm:$0xff]
    %v1057 = vld [vmem:[#allocation2 + $0x190] sm:$0xff]
    %v1058 = vld [vmem:[#allocation2 + $0x198] sm:$0xff]
    %v1059 = vld [vmem:[#allocation2 + $0x1a0] sm:$0xff]
    %v1060 = vld [vmem:[#allocation2 + $0x1a8] sm:$0xff]
    %v1061 = vld [vmem:[#allocation2 + $0x1b0] sm:$0xff]
    %v1062 = vld [vmem:[#allocation2 + $0x1b8] sm:$0xff]
    %v1063 = vld [vmem:[#allocation2 + $0x1c0] sm:$0xff]
    %v1064 = vld [vmem:[#allocation2 + $0x1c8] sm:$0xff]
    %v1065 = vld [vmem:[#allocation2 + $0x1d0] sm:$0xff]
    %v1066 = vld [vmem:[#allocation2 + $0x1d8] sm:$0xff]
    %v1067 = vld [vmem:[#allocation2 + $0x1e0] sm:$0xff]
    %v1068 = vld [vmem:[#allocation2 + $0x1e8] sm:$0xff]
    %v1069 = vld [vmem:[#allocation2 + $0x1f0] sm:$0xff]
    %v1070 = vld [vmem:[#allocation2 + $0x1f8] sm:$0xff]
    %1071 = vmatprep.subr.mxu0 %v1008
    %1072 = vmatpush1.msra.mxu0 %v1007
    %1073 = vmatprep.subr.mxu0 %v1010
    %1074 = vmatpush1.msra.mxu0 %v1009
    %1075 = vmatprep.subr.mxu0 %v1012
    %1076 = vmatpush1.msra.mxu0 %v1011
    %1077 = vmatprep.subr.mxu0 %v1014
    %1078 = vmatpush1.msra.mxu0 %v1013
    %1079 = vmatprep.subr.mxu0 %v1016
    %1080 = vmatpush1.msra.mxu0 %v1015
    %1081 = vmatprep.subr.mxu0 %v1018
    %1082 = vmatpush1.msra.mxu0 %v1017
    %1083 = vmatprep.subr.mxu0 %v1020
    %1084 = vmatpush1.msra.mxu0 %v1019
    %1085 = vmatprep.subr.mxu0 %v1022
    %1086 = vmatpush1.msra.mxu0 %v1021
    %1087 = vmatprep.subr.mxu0 %v1024
    %1088 = vmatpush1.msra.mxu0 %v1023
    %1089 = vmatprep.subr.mxu0 %v1026
    %1090 = vmatpush1.msra.mxu0 %v1025
    %1091 = vmatprep.subr.mxu0 %v1028
    %1092 = vmatpush1.msra.mxu0 %v1027
    %1093 = vmatprep.subr.mxu0 %v1030
    %1094 = vmatpush1.msra.mxu0 %v1029
    %1095 = vmatprep.subr.mxu0 %v1032
    %1096 = vmatpush1.msra.mxu0 %v1031
    %1097 = vmatprep.subr.mxu0 %v1034
    %1098 = vmatpush1.msra.mxu0 %v1033
    %1099 = vmatprep.subr.mxu0 %v1036
    %1100 = vmatpush1.msra.mxu0 %v1035
    %1101 = vmatprep.subr.mxu0 %v1038
    %1102 = vmatpush1.msra.mxu0 %v1037
    %1103 = vmatprep.subr.mxu0 %v1040
    %1104 = vmatpush1.msra.mxu0 %v1039
    %1105 = vmatprep.subr.mxu0 %v1042
    %1106 = vmatpush1.msra.mxu0 %v1041
    %1107 = vmatprep.subr.mxu0 %v1044
    %1108 = vmatpush1.msra.mxu0 %v1043
    %1109 = vmatprep.subr.mxu0 %v1046
    %1110 = vmatpush1.msra.mxu0 %v1045
    %1111 = vmatprep.subr.mxu0 %v1048
    %1112 = vmatpush1.msra.mxu0 %v1047
    %1113 = vmatprep.subr.mxu0 %v1050
    %1114 = vmatpush1.msra.mxu0 %v1049
    %1115 = vmatprep.subr.mxu0 %v1052
    %1116 = vmatpush1.msra.mxu0 %v1051
    %1117 = vmatprep.subr.mxu0 %v1054
    %1118 = vmatpush1.msra.mxu0 %v1053
    %1119 = vmatprep.subr.mxu0 %v1056
    %1120 = vmatpush1.msra.mxu0 %v1055
    %1121 = vmatprep.subr.mxu0 %v1058
    %1122 = vmatpush1.msra.mxu0 %v1057
    %1123 = vmatprep.subr.mxu0 %v1060
    %1124 = vmatpush1.msra.mxu0 %v1059
    %1125 = vmatprep.subr.mxu0 %v1062
    %1126 = vmatpush1.msra.mxu0 %v1061
    %1127 = vmatprep.subr.mxu0 %v1064
    %1128 = vmatpush1.msra.mxu0 %v1063
    %1129 = vmatprep.subr.mxu0 %v1066
    %1130 = vmatpush1.msra.mxu0 %v1065
    %1131 = vmatprep.subr.mxu0 %v1068
    %1132 = vmatpush1.msra.mxu0 %v1067
    %1133 = vmatprep.subr.mxu0 %v1070
    %1134 = vmatpush1.msra.mxu0 %v1069
    %1135 = vmatprep.mubr.f32.mxu0 %v1000
    %1136 = vmatmul.mubr.f32.gmra.mrb[0].mxu0 %v999
    %v1137 = vpop.f32.mrb[0].mxu0
    %v1138 = vadd.f32 0.0, %v1137
    %v1139 = vpop.f32.mrb[0].mxu0
    %v1140 = vadd.f32 0.0, %v1139
    %1141 = vdwg.mxu0
    %v1142 = vmul.f32 %v1138, 0.5
    %v1143 = vmul.f32 %v1140, 0.5
    %v1144 = vadd.f32 %v1142, %v188
    %v1145 = vadd.f32 %v1143, %v189
    %v1146 = vtanh.pop %v1144
    %v1147 = vtanh.pop %v1145
    %v1148 = vmul.f32 %v993, 0.5
    %v1149 = vmul.f32 %v994, 0.5
    %v1150 = vsub.f32 1.0, %v999
    %v1151 = vsub.f32 1.0, %v1000
    %v1152 = vmul.f32 %v1150, 0.5
    %v1153 = vmul.f32 %v1151, 0.5
    %v1154 = vsub.f32 %v1148, %v1152
    %v1155 = vsub.f32 %v1149, %v1153
    %v1156 = vadd.f32 %v1154, %v1146
    %v1157 = vadd.f32 %v1155, %v1147
    %vm1158 = vcmp.gt.f32.partialorder %v1156, 0.5
    %vm1159 = vcmp.gt.f32.partialorder %v1157, 0.5
    %v1160 = vsel %vm1158, 1, 0
    %v1161 = vsel %vm1159, 1, 0
    %v1162 = vcvt.s32.f32 %v1160
    %v1163 = vcvt.s32.f32 %v1161
    %s1164 = scalar_lea.vmem %s5, 96
    %1165 = vst [vmem:[%s1164] sm:$0xff] %v1156
    %1166 = vst [vmem:[%s1164 + $0x8] sm:$0xff] %v1157
    %s1167 = scalar_lea.vmem %s6, 96
    %1168 = vst [vmem:[%s1167] sm:$0xff] %v1162
    %1169 = vst [vmem:[%s1167 + $0x8] sm:$0xff] %v1163
    // Predicated region
    $region26: #{multirc_forward.1} parent=1 // pred_check
      _
    $region27: #{multirc_forward.1} parent=1 // pred_check_branch
      %1171 = sbr.rel (0) target = $region29
    $region28: #{multirc_forward.1} parent=1 // pred_region
      _
    $region29: #{multirc_forward.1} parent=1 // pred_fallthru
      _
    // Predicated region
    $region30: #{multirc_forward.1} parent=1 // pred_check
      _
    $region31: #{multirc_forward.1} parent=1 // pred_check_branch
      %1173 = sbr.rel (0) target = $region33
    $region32: #{multirc_forward.1} parent=1 // pred_region
      _
    $region33: #{multirc_forward.1} parent=1 // pred_fallthru
      _
    // Predicated region
    $region34: #{multirc_forward.1} parent=1 // pred_check
      _
    $region35: #{multirc_forward.1} parent=1 // pred_check_branch
      %1175 = sbr.rel (0) target = $region37
    $region36: #{multirc_forward.1} parent=1 // pred_region
      _
    $region37: #{multirc_forward.1} parent=1 // pred_fallthru
      _
    // Predicated region
    $region38: #{multirc_forward.1} parent=1 // pred_check
      _
    $region39: #{multirc_forward.1} parent=1 // pred_check_branch
      %1177 = sbr.rel (0) target = $region41
    $region40: #{multirc_forward.1} parent=1 // pred_region
      _
    $region41: #{multirc_forward.1} parent=1 // pred_fallthru
      _
    %1178 = vsyncpa [#allocation3], 1

</llo_original>
